<compile_context>
chip_gen: v7x
topology: tpu7x:2x2x1
jax: 0.10.0
libtpu: 0.0.40
codegen_flags: <defaults>
</compile_context>

<pallas_src>
import functools

import jax
import jax.numpy as jnp
import numpy as np
from jax.experimental import pallas as pl
from jax.experimental.pallas import tpu as pltpu


def _round_up(x, m):
    return (x + m - 1) // m * m


def _lstm_head_kernel(x_ref, opb_ref, wih_ref, whh_ref, bias_ref,
                      h0_ref, c0_ref, wlh_ref, out_ref, *, use_bf16):
    """One batch tile: ReLU(embed) -> hoisted input projection -> unrolled LSTM -> ReLU -> linear -> sigmoid."""
    T, Bblk, E = x_ref.shape
    Hp = h0_ref.shape[1]
    G = 4 * Hp
    mm_dtype = jnp.bfloat16 if use_bf16 else jnp.float32

    # ReLU of the embedded sequence, whole tile at once: (T, Bblk, E)
    x = jnp.maximum(x_ref[...], 0.0)

    # Hoisted input projection for all T steps and all batch rows in one matmul.
    xg = jnp.dot(x.reshape(T * Bblk, E).astype(mm_dtype),
                 wih_ref[...].astype(mm_dtype),
                 preferred_element_type=jnp.float32) + bias_ref[...]     # (T*Bblk, 4Hp)
    xg = xg.reshape(T, Bblk, G)

    whh = whh_ref[...].astype(mm_dtype)                                  # (Hp, 4Hp)

    h = jnp.broadcast_to(h0_ref[...], (Bblk, Hp))
    c = jnp.broadcast_to(c0_ref[...], (Bblk, Hp))

    # Statically unrolled recurrence (T is small and fixed).
    for t in range(T):
        gates = xg[t] + jnp.dot(h.astype(mm_dtype), whh,
                                preferred_element_type=jnp.float32)      # (Bblk, 4Hp)
        # Hp is a multiple of 128 -> every slice below is vreg-lane aligned.
        i = jax.nn.sigmoid(gates[:, 0 * Hp:1 * Hp])
        f = jax.nn.sigmoid(gates[:, 1 * Hp:2 * Hp])
        g = jnp.tanh(gates[:, 2 * Hp:3 * Hp])
        o = jax.nn.sigmoid(gates[:, 3 * Hp:4 * Hp])
        c = f * c + i * g
        h = o * jnp.tanh(c)

    h = jnp.maximum(h, 0.0)                                              # ReLU of last recurrent output

    # Feature union tail: operator contribution (+ linear bias) was precomputed outside the kernel.
    logits = jnp.dot(h.astype(mm_dtype), wlh_ref[...].astype(mm_dtype),
                     preferred_element_type=jnp.float32) + opb_ref[...]  # (Bblk, 128), cols >=2 are padding
    out_ref[...] = jax.nn.sigmoid(logits)                                # eval mode -> sigmoid


@functools.partial(jax.jit, static_argnames=("use_bf16",))
def recurrent_classifier_operator_forward(x_emb, op_onehot, w_ih, w_hh, b_ih, b_hh,
                                          h0, c0, w_lin, b_lin, *, use_bf16=False):
    """x_emb: (B, T, E) embedded+gathered sequences; op_onehot: (B, P); weights in PyTorch layout."""
    B, T, E = x_emb.shape
    H = w_hh.shape[1]
    Hp = _round_up(H, 128)          # lane-aligned hidden dim (each gate = whole vreg spans)
    Cp = 128                        # lane-dense output slab; real classes = 2
    Bblk = min(128, _round_up(B, 8))
    Bpad = _round_up(B, Bblk)
    # NOTE(v7x): for large B, choose Bblk so the grid has >= 2 programs to feed both TensorCores.

    f32 = jnp.float32

    # ---- weight packing (plain XLA glue): pad each gate block of the 4H axis to Hp ----
    def pack_gate_cols(w):          # w: (4H, K) rows stacked i,f,g,o -> (K, 4*Hp)
        K = w.shape[1]
        w4 = w.astype(f32).reshape(4, H, K)
        w4p = jnp.zeros((4, Hp, K), f32).at[:, :H, :].set(w4)
        return w4p.reshape(4 * Hp, K).T

    w_ih_t = pack_gate_cols(w_ih)                                              # (E, 4Hp)
    w_hh_t = jnp.zeros((Hp, 4 * Hp), f32).at[:H, :].set(pack_gate_cols(w_hh))  # (Hp, 4Hp), pad rows zero
    b4 = (b_ih + b_hh).astype(f32).reshape(4, H)
    bias = jnp.zeros((4, Hp), f32).at[:, :H].set(b4).reshape(1, 4 * Hp)        # (1, 4Hp)
    h0p = jnp.zeros((1, Hp), f32).at[:, :H].set(h0.astype(f32).reshape(1, H))
    c0p = jnp.zeros((1, Hp), f32).at[:, :H].set(c0.astype(f32).reshape(1, H))
    w_lin_h = jnp.zeros((Hp, Cp), f32).at[:H, :2].set(w_lin[:, :H].astype(f32).T)

    # operator branch + linear bias: independent of the LSTM -> compute in plain XLA
    op_bias = op_onehot.astype(f32) @ w_lin[:, H:].astype(f32).T + b_lin.astype(f32).reshape(1, 2)
    op_bias = jnp.zeros((Bpad, Cp), f32).at[:B, :2].set(op_bias)               # (Bpad, 128)

    # time-major input, batch padded with zeros (padded rows are discarded at the end)
    x_tm = jnp.transpose(x_emb.astype(f32), (1, 0, 2))                          # (T, B, E)
    x_tm = jnp.zeros((T, Bpad, E), f32).at[:, :B, :].set(x_tm)

    kernel = functools.partial(_lstm_head_kernel, use_bf16=use_bf16)
    out = pl.pallas_call(
        kernel,
        out_shape=jax.ShapeDtypeStruct((Bpad, Cp), f32),
        grid=(Bpad // Bblk,),
        in_specs=[
            pl.BlockSpec((T, Bblk, E), lambda b: (0, b, 0)),    # time-major embedded sequences
            pl.BlockSpec((Bblk, Cp), lambda b: (b, 0)),         # per-row operator contribution + bias
            pl.BlockSpec((E, 4 * Hp), lambda b: (0, 0)),        # W_ih^T (gate-padded)
            pl.BlockSpec((Hp, 4 * Hp), lambda b: (0, 0)),       # W_hh^T (row- and gate-padded)
            pl.BlockSpec((1, 4 * Hp), lambda b: (0, 0)),        # b_ih + b_hh (gate-padded)
            pl.BlockSpec((1, Hp), lambda b: (0, 0)),            # h0 (padded)
            pl.BlockSpec((1, Hp), lambda b: (0, 0)),            # c0 (padded)
            pl.BlockSpec((Hp, Cp), lambda b: (0, 0)),           # W_lin[:, :H]^T (padded)
        ],
        out_specs=pl.BlockSpec((Bblk, Cp), lambda b: (b, 0)),
        compiler_params=pltpu.CompilerParams(dimension_semantics=("parallel",)),
    )(x_tm, op_bias, w_ih_t, w_hh_t, bias, h0p, c0p, w_lin_h)

    return out[:B, :2]


def _reference_forward(x_emb, op_onehot, w_ih, w_hh, b_ih, b_hh, h0, c0, w_lin, b_lin):
    """Pure-JAX f32 reference of the same math (per-example recurrent passes), for verification."""
    B, T, E = x_emb.shape
    H = w_hh.shape[1]
    w_ih_t, w_hh_t = w_ih.T, w_hh.T
    bias = (b_ih + b_hh).reshape(1, 4 * H)
    outs = []
    for b in range(B):
        x = jnp.maximum(x_emb[b], 0.0)
        h, c = h0.reshape(1, H), c0.reshape(1, H)
        for t in range(T):
            gates = x[t:t + 1] @ w_ih_t + h @ w_hh_t + bias
            i = jax.nn.sigmoid(gates[:, 0 * H:1 * H])
            f = jax.nn.sigmoid(gates[:, 1 * H:2 * H])
            g = jnp.tanh(gates[:, 2 * H:3 * H])
            o = jax.nn.sigmoid(gates[:, 3 * H:4 * H])
            c = f * c + i * g
            h = o * jnp.tanh(c)
        h = jnp.maximum(h, 0.0)
        logits = jnp.concatenate([h, op_onehot[b:b + 1]], axis=1) @ w_lin.T + b_lin.reshape(1, 2)
        outs.append(jax.nn.sigmoid(logits)[0])
    return jnp.stack(outs)


if __name__ == "__main__":
    # ---- synthetic configuration (small, consistent with the module's __init__) ----
    B = 2                 # batch size (indices of shape [B, 1])
    T = 8                 # bytecode sequence length
    VOCAB = 16            # vocabulary_size (embedding table has 2*VOCAB rows)
    E = 32                # input_size (embedding dim)
    H = 20                # recurrent_hidden_dim
    P = 4                 # operators_size (one-hot width)

    key = jax.random.PRNGKey(0)
    ks = jax.random.split(key, 10)

    # ---- deterministic parameters (shapes follow torch.nn.Embedding / LSTM / Linear) ----
    emb_weight = jax.random.normal(ks[0], (2 * VOCAB, E), jnp.float32) * 0.1
    w_ih = jax.random.normal(ks[1], (4 * H, E), jnp.float32) * 0.1     # PyTorch weight_ih_l0
    w_hh = jax.random.normal(ks[2], (4 * H, H), jnp.float32) * 0.1     # PyTorch weight_hh_l0
    b_ih = jax.random.normal(ks[3], (4 * H,), jnp.float32) * 0.1
    b_hh = jax.random.normal(ks[4], (4 * H,), jnp.float32) * 0.1
    h0 = jnp.zeros((1, 1, H), jnp.float32)                             # recurrent_state param (zeros)
    c0 = jnp.zeros((1, 1, H), jnp.float32)                             # cell_state param (zeros)
    w_lin = jax.random.normal(ks[5], (2, H + P), jnp.float32) * 0.1    # Linear(H+P, 2)
    b_lin = jax.random.normal(ks[6], (2,), jnp.float32) * 0.1

    # ---- synthetic "dataset" + skorch-style index lookup (glue, plain JAX) ----
    n_data = 6
    data_buggy = jax.random.randint(ks[7], (n_data, T), 0, 2 * VOCAB)      # token ids
    data_operator = jax.random.randint(ks[8], (n_data,), 0, P)             # operator category id
    indices = jnp.array([[1], [4]], dtype=jnp.int32)                       # forward() input [B, 1]

    buggy_tokens = data_buggy[indices[:, 0]]                               # [B, T]
    op_ids = data_operator[indices[:, 0]]                                  # [B]
    x_emb = emb_weight[buggy_tokens]                                       # [B, T, E]  embedding gather
    op_onehot = jax.nn.one_hot(op_ids, P, dtype=jnp.float32)               # [B, P]     OneHotEncoder

    ref = _reference_forward(x_emb, op_onehot, w_ih, w_hh, b_ih, b_hh, h0, c0, w_lin, b_lin)

    # f32 matmul path (bit-faithful to the PyTorch module)
    out = recurrent_classifier_operator_forward(
        x_emb, op_onehot, w_ih, w_hh, b_ih, b_hh, h0, c0, w_lin, b_lin, use_bf16=False)
    out = jax.block_until_ready(out)
    np.testing.assert_allclose(np.asarray(out), np.asarray(ref), rtol=1e-4, atol=1e-5)

    # bf16 MXU operand path (f32 accumulation + f32 elementwise), looser tolerance
    out_bf16 = recurrent_classifier_operator_forward(
        x_emb, op_onehot, w_ih, w_hh, b_ih, b_hh, h0, c0, w_lin, b_lin, use_bf16=True)
    out_bf16 = jax.block_until_ready(out_bf16)
    np.testing.assert_allclose(np.asarray(out_bf16), np.asarray(ref), rtol=2e-2, atol=2e-2)

    print("KERNEL_OK")
</pallas_src>

<mosaic_0001>
module attributes {stable_mosaic.version = 11 : i64} {
  func.func @_lstm_head_kernel(%arg0: i32, %arg1: memref<8x8x32xf32, #tpu.memory_space<vmem>>, %arg2: memref<8x128xf32, #tpu.memory_space<vmem>>, %arg3: memref<32x512xf32, #tpu.memory_space<vmem>>, %arg4: memref<128x512xf32, #tpu.memory_space<vmem>>, %arg5: memref<1x512xf32, #tpu.memory_space<vmem>>, %arg6: memref<1x128xf32, #tpu.memory_space<vmem>>, %arg7: memref<1x128xf32, #tpu.memory_space<vmem>>, %arg8: memref<128x128xf32, #tpu.memory_space<vmem>>, %arg9: memref<8x128xf32, #tpu.memory_space<vmem>>) attributes {dimension_semantics = [#tpu.dimension_semantics<parallel>], iteration_bounds = array<i64: 1>, scalar_prefetch = 0 : i64, scratch_operands = 0 : i64, tpu.core_type = #tpu.core_type<tc>, window_params = [{transform_indices = @transform_0, window_bounds = array<i64: 8, 8, 32>}, {transform_indices = @transform_1, window_bounds = array<i64: 8, 128>}, {pipeline_mode = #tpu.pipeline_mode<synchronous>, transform_indices = @transform_2, window_bounds = array<i64: 32, 512>}, {pipeline_mode = #tpu.pipeline_mode<synchronous>, transform_indices = @transform_3, window_bounds = array<i64: 128, 512>}, {pipeline_mode = #tpu.pipeline_mode<synchronous>, transform_indices = @transform_4, window_bounds = array<i64: 1, 512>}, {pipeline_mode = #tpu.pipeline_mode<synchronous>, transform_indices = @transform_5, window_bounds = array<i64: 1, 128>}, {pipeline_mode = #tpu.pipeline_mode<synchronous>, transform_indices = @transform_6, window_bounds = array<i64: 1, 128>}, {pipeline_mode = #tpu.pipeline_mode<synchronous>, transform_indices = @transform_7, window_bounds = array<i64: 128, 128>}, {transform_indices = @transform_8, window_bounds = array<i64: 8, 128>}]} {
    %c0 = arith.constant 0 : index
    %c0_0 = arith.constant 0 : index
    %c0_1 = arith.constant 0 : index
    %0 = vector.load %arg1[%c0, %c0_0, %c0_1] : memref<8x8x32xf32, #tpu.memory_space<vmem>>, vector<8x8x32xf32>
    %cst = arith.constant 0.000000e+00 : f32
    %1 = vector.broadcast %cst : f32 to vector<8x8x32xf32>
    %2 = arith.maximumf %0, %1 : vector<8x8x32xf32>
    %3 = vector.shape_cast %2 : vector<8x8x32xf32> to vector<64x32xf32>
    %c0_2 = arith.constant 0 : index
    %c0_3 = arith.constant 0 : index
    %4 = vector.load %arg3[%c0_2, %c0_3] : memref<32x512xf32, #tpu.memory_space<vmem>>, vector<32x512xf32>
    %cst_4 = arith.constant dense<0.000000e+00> : vector<64x512xf32>
    %5 = tpu.matmul %3, %4, %cst_4 {dimension_numbers = #tpu.dot_dimension_numbers<[1], [0], [0], [1], [0, 0, 1, 1], [], []>} : vector<64x32xf32>, vector<32x512xf32>, vector<64x512xf32> -> vector<64x512xf32>
    %c0_5 = arith.constant 0 : index
    %c0_6 = arith.constant 0 : index
    %6 = vector.load %arg5[%c0_5, %c0_6] : memref<1x512xf32, #tpu.memory_space<vmem>>, vector<1x512xf32>
    %7 = vector.broadcast %6 : vector<1x512xf32> to vector<64x512xf32>
    %8 = arith.addf %5, %7 : vector<64x512xf32>
    %9 = vector.shape_cast %8 : vector<64x512xf32> to vector<8x8x512xf32>
    %c0_7 = arith.constant 0 : index
    %c0_8 = arith.constant 0 : index
    %10 = vector.load %arg4[%c0_7, %c0_8] : memref<128x512xf32, #tpu.memory_space<vmem>>, vector<128x512xf32>
    %c0_9 = arith.constant 0 : index
    %c0_10 = arith.constant 0 : index
    %11 = vector.load %arg6[%c0_9, %c0_10] : memref<1x128xf32, #tpu.memory_space<vmem>>, vector<1x128xf32>
    %12 = vector.shape_cast %11 : vector<1x128xf32> to vector<1x128xf32>
    %13 = vector.broadcast %12 : vector<1x128xf32> to vector<8x128xf32>
    %c0_11 = arith.constant 0 : index
    %c0_12 = arith.constant 0 : index
    %14 = vector.load %arg7[%c0_11, %c0_12] : memref<1x128xf32, #tpu.memory_space<vmem>>, vector<1x128xf32>
    %15 = vector.shape_cast %14 : vector<1x128xf32> to vector<1x128xf32>
    %16 = vector.broadcast %15 : vector<1x128xf32> to vector<8x128xf32>
    %17 = vector.extract_strided_slice %9 {offsets = [0, 0, 0], sizes = [1, 8, 512], strides = [1, 1, 1]} : vector<8x8x512xf32> to vector<1x8x512xf32>
    %18 = vector.shape_cast %17 : vector<1x8x512xf32> to vector<8x512xf32>
    %cst_13 = arith.constant dense<0.000000e+00> : vector<8x512xf32>
    %19 = tpu.matmul %13, %10, %cst_13 {dimension_numbers = #tpu.dot_dimension_numbers<[1], [0], [0], [1], [0, 0, 1, 1], [], []>} : vector<8x128xf32>, vector<128x512xf32>, vector<8x512xf32> -> vector<8x512xf32>
    %20 = arith.addf %18, %19 : vector<8x512xf32>
    %21 = vector.extract_strided_slice %20 {offsets = [0, 0], sizes = [8, 128], strides = [1, 1]} : vector<8x512xf32> to vector<8x128xf32>
    %22 = arith.negf %21 : vector<8x128xf32>
    %23 = math.exp %22 : vector<8x128xf32>
    %cst_14 = arith.constant 1.000000e+00 : f32
    %24 = vector.broadcast %cst_14 : f32 to vector<8x128xf32>
    %25 = arith.addf %24, %23 : vector<8x128xf32>
    %26 = arith.divf %24, %25 : vector<8x128xf32>
    %27 = vector.extract_strided_slice %20 {offsets = [0, 128], sizes = [8, 128], strides = [1, 1]} : vector<8x512xf32> to vector<8x128xf32>
    %28 = arith.negf %27 : vector<8x128xf32>
    %29 = math.exp %28 : vector<8x128xf32>
    %cst_15 = arith.constant 1.000000e+00 : f32
    %30 = vector.broadcast %cst_15 : f32 to vector<8x128xf32>
    %31 = arith.addf %30, %29 : vector<8x128xf32>
    %32 = arith.divf %30, %31 : vector<8x128xf32>
    %33 = vector.extract_strided_slice %20 {offsets = [0, 256], sizes = [8, 128], strides = [1, 1]} : vector<8x512xf32> to vector<8x128xf32>
    %34 = math.tanh %33 : vector<8x128xf32>
    %35 = vector.extract_strided_slice %20 {offsets = [0, 384], sizes = [8, 128], strides = [1, 1]} : vector<8x512xf32> to vector<8x128xf32>
    %36 = arith.negf %35 : vector<8x128xf32>
    %37 = math.exp %36 : vector<8x128xf32>
    %cst_16 = arith.constant 1.000000e+00 : f32
    %38 = vector.broadcast %cst_16 : f32 to vector<8x128xf32>
    %39 = arith.addf %38, %37 : vector<8x128xf32>
    %40 = arith.divf %38, %39 : vector<8x128xf32>
    %41 = arith.mulf %32, %16 : vector<8x128xf32>
    %42 = arith.mulf %26, %34 : vector<8x128xf32>
    %43 = arith.addf %41, %42 : vector<8x128xf32>
    %44 = math.tanh %43 : vector<8x128xf32>
    %45 = arith.mulf %40, %44 : vector<8x128xf32>
    %46 = vector.extract_strided_slice %9 {offsets = [1, 0, 0], sizes = [1, 8, 512], strides = [1, 1, 1]} : vector<8x8x512xf32> to vector<1x8x512xf32>
    %47 = vector.shape_cast %46 : vector<1x8x512xf32> to vector<8x512xf32>
    %cst_17 = arith.constant dense<0.000000e+00> : vector<8x512xf32>
    %48 = tpu.matmul %45, %10, %cst_17 {dimension_numbers = #tpu.dot_dimension_numbers<[1], [0], [0], [1], [0, 0, 1, 1], [], []>} : vector<8x128xf32>, vector<128x512xf32>, vector<8x512xf32> -> vector<8x512xf32>
    %49 = arith.addf %47, %48 : vector<8x512xf32>
    %50 = vector.extract_strided_slice %49 {offsets = [0, 0], sizes = [8, 128], strides = [1, 1]} : vector<8x512xf32> to vector<8x128xf32>
    %51 = arith.negf %50 : vector<8x128xf32>
    %52 = math.exp %51 : vector<8x128xf32>
    %cst_18 = arith.constant 1.000000e+00 : f32
    %53 = vector.broadcast %cst_18 : f32 to vector<8x128xf32>
    %54 = arith.addf %53, %52 : vector<8x128xf32>
    %55 = arith.divf %53, %54 : vector<8x128xf32>
    %56 = vector.extract_strided_slice %49 {offsets = [0, 128], sizes = [8, 128], strides = [1, 1]} : vector<8x512xf32> to vector<8x128xf32>
    %57 = arith.negf %56 : vector<8x128xf32>
    %58 = math.exp %57 : vector<8x128xf32>
    %cst_19 = arith.constant 1.000000e+00 : f32
    %59 = vector.broadcast %cst_19 : f32 to vector<8x128xf32>
    %60 = arith.addf %59, %58 : vector<8x128xf32>
    %61 = arith.divf %59, %60 : vector<8x128xf32>
    %62 = vector.extract_strided_slice %49 {offsets = [0, 256], sizes = [8, 128], strides = [1, 1]} : vector<8x512xf32> to vector<8x128xf32>
    %63 = math.tanh %62 : vector<8x128xf32>
    %64 = vector.extract_strided_slice %49 {offsets = [0, 384], sizes = [8, 128], strides = [1, 1]} : vector<8x512xf32> to vector<8x128xf32>
    %65 = arith.negf %64 : vector<8x128xf32>
    %66 = math.exp %65 : vector<8x128xf32>
    %cst_20 = arith.constant 1.000000e+00 : f32
    %67 = vector.broadcast %cst_20 : f32 to vector<8x128xf32>
    %68 = arith.addf %67, %66 : vector<8x128xf32>
    %69 = arith.divf %67, %68 : vector<8x128xf32>
    %70 = arith.mulf %61, %43 : vector<8x128xf32>
    %71 = arith.mulf %55, %63 : vector<8x128xf32>
    %72 = arith.addf %70, %71 : vector<8x128xf32>
    %73 = math.tanh %72 : vector<8x128xf32>
    %74 = arith.mulf %69, %73 : vector<8x128xf32>
    %75 = vector.extract_strided_slice %9 {offsets = [2, 0, 0], sizes = [1, 8, 512], strides = [1, 1, 1]} : vector<8x8x512xf32> to vector<1x8x512xf32>
    %76 = vector.shape_cast %75 : vector<1x8x512xf32> to vector<8x512xf32>
    %cst_21 = arith.constant dense<0.000000e+00> : vector<8x512xf32>
    %77 = tpu.matmul %74, %10, %cst_21 {dimension_numbers = #tpu.dot_dimension_numbers<[1], [0], [0], [1], [0, 0, 1, 1], [], []>} : vector<8x128xf32>, vector<128x512xf32>, vector<8x512xf32> -> vector<8x512xf32>
    %78 = arith.addf %76, %77 : vector<8x512xf32>
    %79 = vector.extract_strided_slice %78 {offsets = [0, 0], sizes = [8, 128], strides = [1, 1]} : vector<8x512xf32> to vector<8x128xf32>
    %80 = arith.negf %79 : vector<8x128xf32>
    %81 = math.exp %80 : vector<8x128xf32>
    %cst_22 = arith.constant 1.000000e+00 : f32
    %82 = vector.broadcast %cst_22 : f32 to vector<8x128xf32>
    %83 = arith.addf %82, %81 : vector<8x128xf32>
    %84 = arith.divf %82, %83 : vector<8x128xf32>
    %85 = vector.extract_strided_slice %78 {offsets = [0, 128], sizes = [8, 128], strides = [1, 1]} : vector<8x512xf32> to vector<8x128xf32>
    %86 = arith.negf %85 : vector<8x128xf32>
    %87 = math.exp %86 : vector<8x128xf32>
    %cst_23 = arith.constant 1.000000e+00 : f32
    %88 = vector.broadcast %cst_23 : f32 to vector<8x128xf32>
    %89 = arith.addf %88, %87 : vector<8x128xf32>
    %90 = arith.divf %88, %89 : vector<8x128xf32>
    %91 = vector.extract_strided_slice %78 {offsets = [0, 256], sizes = [8, 128], strides = [1, 1]} : vector<8x512xf32> to vector<8x128xf32>
    %92 = math.tanh %91 : vector<8x128xf32>
    %93 = vector.extract_strided_slice %78 {offsets = [0, 384], sizes = [8, 128], strides = [1, 1]} : vector<8x512xf32> to vector<8x128xf32>
    %94 = arith.negf %93 : vector<8x128xf32>
    %95 = math.exp %94 : vector<8x128xf32>
    %cst_24 = arith.constant 1.000000e+00 : f32
    %96 = vector.broadcast %cst_24 : f32 to vector<8x128xf32>
    %97 = arith.addf %96, %95 : vector<8x128xf32>
    %98 = arith.divf %96, %97 : vector<8x128xf32>
    %99 = arith.mulf %90, %72 : vector<8x128xf32>
    %100 = arith.mulf %84, %92 : vector<8x128xf32>
    %101 = arith.addf %99, %100 : vector<8x128xf32>
    %102 = math.tanh %101 : vector<8x128xf32>
    %103 = arith.mulf %98, %102 : vector<8x128xf32>
    %104 = vector.extract_strided_slice %9 {offsets = [3, 0, 0], sizes = [1, 8, 512], strides = [1, 1, 1]} : vector<8x8x512xf32> to vector<1x8x512xf32>
    %105 = vector.shape_cast %104 : vector<1x8x512xf32> to vector<8x512xf32>
    %cst_25 = arith.constant dense<0.000000e+00> : vector<8x512xf32>
    %106 = tpu.matmul %103, %10, %cst_25 {dimension_numbers = #tpu.dot_dimension_numbers<[1], [0], [0], [1], [0, 0, 1, 1], [], []>} : vector<8x128xf32>, vector<128x512xf32>, vector<8x512xf32> -> vector<8x512xf32>
    %107 = arith.addf %105, %106 : vector<8x512xf32>
    %108 = vector.extract_strided_slice %107 {offsets = [0, 0], sizes = [8, 128], strides = [1, 1]} : vector<8x512xf32> to vector<8x128xf32>
    %109 = arith.negf %108 : vector<8x128xf32>
    %110 = math.exp %109 : vector<8x128xf32>
    %cst_26 = arith.constant 1.000000e+00 : f32
    %111 = vector.broadcast %cst_26 : f32 to vector<8x128xf32>
    %112 = arith.addf %111, %110 : vector<8x128xf32>
    %113 = arith.divf %111, %112 : vector<8x128xf32>
    %114 = vector.extract_strided_slice %107 {offsets = [0, 128], sizes = [8, 128], strides = [1, 1]} : vector<8x512xf32> to vector<8x128xf32>
    %115 = arith.negf %114 : vector<8x128xf32>
    %116 = math.exp %115 : vector<8x128xf32>
    %cst_27 = arith.constant 1.000000e+00 : f32
    %117 = vector.broadcast %cst_27 : f32 to vector<8x128xf32>
    %118 = arith.addf %117, %116 : vector<8x128xf32>
    %119 = arith.divf %117, %118 : vector<8x128xf32>
    %120 = vector.extract_strided_slice %107 {offsets = [0, 256], sizes = [8, 128], strides = [1, 1]} : vector<8x512xf32> to vector<8x128xf32>
    %121 = math.tanh %120 : vector<8x128xf32>
    %122 = vector.extract_strided_slice %107 {offsets = [0, 384], sizes = [8, 128], strides = [1, 1]} : vector<8x512xf32> to vector<8x128xf32>
    %123 = arith.negf %122 : vector<8x128xf32>
    %124 = math.exp %123 : vector<8x128xf32>
    %cst_28 = arith.constant 1.000000e+00 : f32
    %125 = vector.broadcast %cst_28 : f32 to vector<8x128xf32>
    %126 = arith.addf %125, %124 : vector<8x128xf32>
    %127 = arith.divf %125, %126 : vector<8x128xf32>
    %128 = arith.mulf %119, %101 : vector<8x128xf32>
    %129 = arith.mulf %113, %121 : vector<8x128xf32>
    %130 = arith.addf %128, %129 : vector<8x128xf32>
    %131 = math.tanh %130 : vector<8x128xf32>
    %132 = arith.mulf %127, %131 : vector<8x128xf32>
    %133 = vector.extract_strided_slice %9 {offsets = [4, 0, 0], sizes = [1, 8, 512], strides = [1, 1, 1]} : vector<8x8x512xf32> to vector<1x8x512xf32>
    %134 = vector.shape_cast %133 : vector<1x8x512xf32> to vector<8x512xf32>
    %cst_29 = arith.constant dense<0.000000e+00> : vector<8x512xf32>
    %135 = tpu.matmul %132, %10, %cst_29 {dimension_numbers = #tpu.dot_dimension_numbers<[1], [0], [0], [1], [0, 0, 1, 1], [], []>} : vector<8x128xf32>, vector<128x512xf32>, vector<8x512xf32> -> vector<8x512xf32>
    %136 = arith.addf %134, %135 : vector<8x512xf32>
    %137 = vector.extract_strided_slice %136 {offsets = [0, 0], sizes = [8, 128], strides = [1, 1]} : vector<8x512xf32> to vector<8x128xf32>
    %138 = arith.negf %137 : vector<8x128xf32>
    %139 = math.exp %138 : vector<8x128xf32>
    %cst_30 = arith.constant 1.000000e+00 : f32
    %140 = vector.broadcast %cst_30 : f32 to vector<8x128xf32>
    %141 = arith.addf %140, %139 : vector<8x128xf32>
    %142 = arith.divf %140, %141 : vector<8x128xf32>
    %143 = vector.extract_strided_slice %136 {offsets = [0, 128], sizes = [8, 128], strides = [1, 1]} : vector<8x512xf32> to vector<8x128xf32>
    %144 = arith.negf %143 : vector<8x128xf32>
    %145 = math.exp %144 : vector<8x128xf32>
    %cst_31 = arith.constant 1.000000e+00 : f32
    %146 = vector.broadcast %cst_31 : f32 to vector<8x128xf32>
    %147 = arith.addf %146, %145 : vector<8x128xf32>
    %148 = arith.divf %146, %147 : vector<8x128xf32>
    %149 = vector.extract_strided_slice %136 {offsets = [0, 256], sizes = [8, 128], strides = [1, 1]} : vector<8x512xf32> to vector<8x128xf32>
    %150 = math.tanh %149 : vector<8x128xf32>
    %151 = vector.extract_strided_slice %136 {offsets = [0, 384], sizes = [8, 128], strides = [1, 1]} : vector<8x512xf32> to vector<8x128xf32>
    %152 = arith.negf %151 : vector<8x128xf32>
    %153 = math.exp %152 : vector<8x128xf32>
    %cst_32 = arith.constant 1.000000e+00 : f32
    %154 = vector.broadcast %cst_32 : f32 to vector<8x128xf32>
    %155 = arith.addf %154, %153 : vector<8x128xf32>
    %156 = arith.divf %154, %155 : vector<8x128xf32>
    %157 = arith.mulf %148, %130 : vector<8x128xf32>
    %158 = arith.mulf %142, %150 : vector<8x128xf32>
    %159 = arith.addf %157, %158 : vector<8x128xf32>
    %160 = math.tanh %159 : vector<8x128xf32>
    %161 = arith.mulf %156, %160 : vector<8x128xf32>
    %162 = vector.extract_strided_slice %9 {offsets = [5, 0, 0], sizes = [1, 8, 512], strides = [1, 1, 1]} : vector<8x8x512xf32> to vector<1x8x512xf32>
    %163 = vector.shape_cast %162 : vector<1x8x512xf32> to vector<8x512xf32>
    %cst_33 = arith.constant dense<0.000000e+00> : vector<8x512xf32>
    %164 = tpu.matmul %161, %10, %cst_33 {dimension_numbers = #tpu.dot_dimension_numbers<[1], [0], [0], [1], [0, 0, 1, 1], [], []>} : vector<8x128xf32>, vector<128x512xf32>, vector<8x512xf32> -> vector<8x512xf32>
    %165 = arith.addf %163, %164 : vector<8x512xf32>
    %166 = vector.extract_strided_slice %165 {offsets = [0, 0], sizes = [8, 128], strides = [1, 1]} : vector<8x512xf32> to vector<8x128xf32>
    %167 = arith.negf %166 : vector<8x128xf32>
    %168 = math.exp %167 : vector<8x128xf32>
    %cst_34 = arith.constant 1.000000e+00 : f32
    %169 = vector.broadcast %cst_34 : f32 to vector<8x128xf32>
    %170 = arith.addf %169, %168 : vector<8x128xf32>
    %171 = arith.divf %169, %170 : vector<8x128xf32>
    %172 = vector.extract_strided_slice %165 {offsets = [0, 128], sizes = [8, 128], strides = [1, 1]} : vector<8x512xf32> to vector<8x128xf32>
    %173 = arith.negf %172 : vector<8x128xf32>
    %174 = math.exp %173 : vector<8x128xf32>
    %cst_35 = arith.constant 1.000000e+00 : f32
    %175 = vector.broadcast %cst_35 : f32 to vector<8x128xf32>
    %176 = arith.addf %175, %174 : vector<8x128xf32>
    %177 = arith.divf %175, %176 : vector<8x128xf32>
    %178 = vector.extract_strided_slice %165 {offsets = [0, 256], sizes = [8, 128], strides = [1, 1]} : vector<8x512xf32> to vector<8x128xf32>
    %179 = math.tanh %178 : vector<8x128xf32>
    %180 = vector.extract_strided_slice %165 {offsets = [0, 384], sizes = [8, 128], strides = [1, 1]} : vector<8x512xf32> to vector<8x128xf32>
    %181 = arith.negf %180 : vector<8x128xf32>
    %182 = math.exp %181 : vector<8x128xf32>
    %cst_36 = arith.constant 1.000000e+00 : f32
    %183 = vector.broadcast %cst_36 : f32 to vector<8x128xf32>
    %184 = arith.addf %183, %182 : vector<8x128xf32>
    %185 = arith.divf %183, %184 : vector<8x128xf32>
    %186 = arith.mulf %177, %159 : vector<8x128xf32>
    %187 = arith.mulf %171, %179 : vector<8x128xf32>
    %188 = arith.addf %186, %187 : vector<8x128xf32>
    %189 = math.tanh %188 : vector<8x128xf32>
    %190 = arith.mulf %185, %189 : vector<8x128xf32>
    %191 = vector.extract_strided_slice %9 {offsets = [6, 0, 0], sizes = [1, 8, 512], strides = [1, 1, 1]} : vector<8x8x512xf32> to vector<1x8x512xf32>
    %192 = vector.shape_cast %191 : vector<1x8x512xf32> to vector<8x512xf32>
    %cst_37 = arith.constant dense<0.000000e+00> : vector<8x512xf32>
    %193 = tpu.matmul %190, %10, %cst_37 {dimension_numbers = #tpu.dot_dimension_numbers<[1], [0], [0], [1], [0, 0, 1, 1], [], []>} : vector<8x128xf32>, vector<128x512xf32>, vector<8x512xf32> -> vector<8x512xf32>
    %194 = arith.addf %192, %193 : vector<8x512xf32>
    %195 = vector.extract_strided_slice %194 {offsets = [0, 0], sizes = [8, 128], strides = [1, 1]} : vector<8x512xf32> to vector<8x128xf32>
    %196 = arith.negf %195 : vector<8x128xf32>
    %197 = math.exp %196 : vector<8x128xf32>
    %cst_38 = arith.constant 1.000000e+00 : f32
    %198 = vector.broadcast %cst_38 : f32 to vector<8x128xf32>
    %199 = arith.addf %198, %197 : vector<8x128xf32>
    %200 = arith.divf %198, %199 : vector<8x128xf32>
    %201 = vector.extract_strided_slice %194 {offsets = [0, 128], sizes = [8, 128], strides = [1, 1]} : vector<8x512xf32> to vector<8x128xf32>
    %202 = arith.negf %201 : vector<8x128xf32>
    %203 = math.exp %202 : vector<8x128xf32>
    %cst_39 = arith.constant 1.000000e+00 : f32
    %204 = vector.broadcast %cst_39 : f32 to vector<8x128xf32>
    %205 = arith.addf %204, %203 : vector<8x128xf32>
    %206 = arith.divf %204, %205 : vector<8x128xf32>
    %207 = vector.extract_strided_slice %194 {offsets = [0, 256], sizes = [8, 128], strides = [1, 1]} : vector<8x512xf32> to vector<8x128xf32>
    %208 = math.tanh %207 : vector<8x128xf32>
    %209 = vector.extract_strided_slice %194 {offsets = [0, 384], sizes = [8, 128], strides = [1, 1]} : vector<8x512xf32> to vector<8x128xf32>
    %210 = arith.negf %209 : vector<8x128xf32>
    %211 = math.exp %210 : vector<8x128xf32>
    %cst_40 = arith.constant 1.000000e+00 : f32
    %212 = vector.broadcast %cst_40 : f32 to vector<8x128xf32>
    %213 = arith.addf %212, %211 : vector<8x128xf32>
    %214 = arith.divf %212, %213 : vector<8x128xf32>
    %215 = arith.mulf %206, %188 : vector<8x128xf32>
    %216 = arith.mulf %200, %208 : vector<8x128xf32>
    %217 = arith.addf %215, %216 : vector<8x128xf32>
    %218 = math.tanh %217 : vector<8x128xf32>
    %219 = arith.mulf %214, %218 : vector<8x128xf32>
    %220 = vector.extract_strided_slice %9 {offsets = [7, 0, 0], sizes = [1, 8, 512], strides = [1, 1, 1]} : vector<8x8x512xf32> to vector<1x8x512xf32>
    %221 = vector.shape_cast %220 : vector<1x8x512xf32> to vector<8x512xf32>
    %cst_41 = arith.constant dense<0.000000e+00> : vector<8x512xf32>
    %222 = tpu.matmul %219, %10, %cst_41 {dimension_numbers = #tpu.dot_dimension_numbers<[1], [0], [0], [1], [0, 0, 1, 1], [], []>} : vector<8x128xf32>, vector<128x512xf32>, vector<8x512xf32> -> vector<8x512xf32>
    %223 = arith.addf %221, %222 : vector<8x512xf32>
    %224 = vector.extract_strided_slice %223 {offsets = [0, 0], sizes = [8, 128], strides = [1, 1]} : vector<8x512xf32> to vector<8x128xf32>
    %225 = arith.negf %224 : vector<8x128xf32>
    %226 = math.exp %225 : vector<8x128xf32>
    %cst_42 = arith.constant 1.000000e+00 : f32
    %227 = vector.broadcast %cst_42 : f32 to vector<8x128xf32>
    %228 = arith.addf %227, %226 : vector<8x128xf32>
    %229 = arith.divf %227, %228 : vector<8x128xf32>
    %230 = vector.extract_strided_slice %223 {offsets = [0, 128], sizes = [8, 128], strides = [1, 1]} : vector<8x512xf32> to vector<8x128xf32>
    %231 = arith.negf %230 : vector<8x128xf32>
    %232 = math.exp %231 : vector<8x128xf32>
    %cst_43 = arith.constant 1.000000e+00 : f32
    %233 = vector.broadcast %cst_43 : f32 to vector<8x128xf32>
    %234 = arith.addf %233, %232 : vector<8x128xf32>
    %235 = arith.divf %233, %234 : vector<8x128xf32>
    %236 = vector.extract_strided_slice %223 {offsets = [0, 256], sizes = [8, 128], strides = [1, 1]} : vector<8x512xf32> to vector<8x128xf32>
    %237 = math.tanh %236 : vector<8x128xf32>
    %238 = vector.extract_strided_slice %223 {offsets = [0, 384], sizes = [8, 128], strides = [1, 1]} : vector<8x512xf32> to vector<8x128xf32>
    %239 = arith.negf %238 : vector<8x128xf32>
    %240 = math.exp %239 : vector<8x128xf32>
    %cst_44 = arith.constant 1.000000e+00 : f32
    %241 = vector.broadcast %cst_44 : f32 to vector<8x128xf32>
    %242 = arith.addf %241, %240 : vector<8x128xf32>
    %243 = arith.divf %241, %242 : vector<8x128xf32>
    %244 = arith.mulf %235, %217 : vector<8x128xf32>
    %245 = arith.mulf %229, %237 : vector<8x128xf32>
    %246 = arith.addf %244, %245 : vector<8x128xf32>
    %247 = math.tanh %246 : vector<8x128xf32>
    %248 = arith.mulf %243, %247 : vector<8x128xf32>
    %cst_45 = arith.constant 0.000000e+00 : f32
    %249 = vector.broadcast %cst_45 : f32 to vector<8x128xf32>
    %250 = arith.maximumf %248, %249 : vector<8x128xf32>
    %c0_46 = arith.constant 0 : index
    %c0_47 = arith.constant 0 : index
    %251 = vector.load %arg8[%c0_46, %c0_47] : memref<128x128xf32, #tpu.memory_space<vmem>>, vector<128x128xf32>
    %cst_48 = arith.constant dense<0.000000e+00> : vector<8x128xf32>
    %252 = tpu.matmul %250, %251, %cst_48 {dimension_numbers = #tpu.dot_dimension_numbers<[1], [0], [0], [1], [0, 0, 1, 1], [], []>} : vector<8x128xf32>, vector<128x128xf32>, vector<8x128xf32> -> vector<8x128xf32>
    %c0_49 = arith.constant 0 : index
    %c0_50 = arith.constant 0 : index
    %253 = vector.load %arg2[%c0_49, %c0_50] : memref<8x128xf32, #tpu.memory_space<vmem>>, vector<8x128xf32>
    %254 = arith.addf %252, %253 : vector<8x128xf32>
    %255 = arith.negf %254 : vector<8x128xf32>
    %256 = math.exp %255 : vector<8x128xf32>
    %cst_51 = arith.constant 1.000000e+00 : f32
    %257 = vector.broadcast %cst_51 : f32 to vector<8x128xf32>
    %258 = arith.addf %257, %256 : vector<8x128xf32>
    %259 = arith.divf %257, %258 : vector<8x128xf32>
    %c0_52 = arith.constant 0 : index
    %c0_53 = arith.constant 0 : index
    %260 = vector.load %arg9[%c0_52, %c0_53] : memref<8x128xf32, #tpu.memory_space<vmem>>, vector<8x128xf32>
    tpu.vector_store %arg9[%c0_52, %c0_53], %259 {strides = array<i32>} : memref<8x128xf32, #tpu.memory_space<vmem>>, vector<8x128xf32>,
    return
  }
  func.func @transform_0(%arg0: i32) -> (i32, i32, i32) {
    %c0_i32 = arith.constant 0 : i32
    %c0_i32_0 = arith.constant 0 : i32
    %c0_i32_1 = arith.constant 0 : i32
    return %c0_i32, %arg0, %c0_i32_0 : i32, i32, i32
  }
  func.func @transform_1(%arg0: i32) -> (i32, i32) {
    %c0_i32 = arith.constant 0 : i32
    %c0_i32_0 = arith.constant 0 : i32
    return %arg0, %c0_i32 : i32, i32
  }
  func.func @transform_2(%arg0: i32) -> (i32, i32) {
    %c0_i32 = arith.constant 0 : i32
    %c0_i32_0 = arith.constant 0 : i32
    %c0_i32_1 = arith.constant 0 : i32
    return %c0_i32, %c0_i32_0 : i32, i32
  }
  func.func @transform_3(%arg0: i32) -> (i32, i32) {
    %c0_i32 = arith.constant 0 : i32
    %c0_i32_0 = arith.constant 0 : i32
    %c0_i32_1 = arith.constant 0 : i32
    return %c0_i32, %c0_i32_0 : i32, i32
  }
  func.func @transform_4(%arg0: i32) -> (i32, i32) {
    %c0_i32 = arith.constant 0 : i32
    %c0_i32_0 = arith.constant 0 : i32
    %c0_i32_1 = arith.constant 0 : i32
    return %c0_i32, %c0_i32_0 : i32, i32
  }
  func.func @transform_5(%arg0: i32) -> (i32, i32) {
    %c0_i32 = arith.constant 0 : i32
    %c0_i32_0 = arith.constant 0 : i32
    %c0_i32_1 = arith.constant 0 : i32
    return %c0_i32, %c0_i32_0 : i32, i32
  }
  func.func @transform_6(%arg0: i32) -> (i32, i32) {
    %c0_i32 = arith.constant 0 : i32
    %c0_i32_0 = arith.constant 0 : i32
    %c0_i32_1 = arith.constant 0 : i32
    return %c0_i32, %c0_i32_0 : i32, i32
  }
  func.func @transform_7(%arg0: i32) -> (i32, i32) {
    %c0_i32 = arith.constant 0 : i32
    %c0_i32_0 = arith.constant 0 : i32
    %c0_i32_1 = arith.constant 0 : i32
    return %c0_i32, %c0_i32_0 : i32, i32
  }
  func.func @transform_8(%arg0: i32) -> (i32, i32) {
    %c0_i32 = arith.constant 0 : i32
    %c0_i32_0 = arith.constant 0 : i32
    return %arg0, %c0_i32 : i32, i32
  }
}

</mosaic_0001>

<llo_original>
// kernel: recurrent_classifier_operator_forward.1
$region0: #{recurrent_classifier_operator_forward.1}
  #allocation0 [shape = 'u32[]', space=smem, size = 0x4, offset = 0x4, fixed_abs, tag = 'smem constant byte address 0x4 - core index']
  #allocation1 [shape = 'u32[144,128]{1,0:T(1,128)}', space=vmem, size = 0x12000, scoped, tag = 'internal scratch']
  %s0 = inlined_call_operand.vmem [shape: f32[8,8,32], index: 0, kind: input, shape index: {}]
  %s1 = inlined_call_operand.vmem [shape: f32[8,128], index: 1, kind: input, shape index: {}]
  %s2 = inlined_call_operand.vmem [shape: f32[32,512], index: 2, kind: input, shape index: {}]
  %s3 = inlined_call_operand.vmem [shape: f32[128,512], index: 3, kind: input, shape index: {}]
  %s4 = inlined_call_operand.vmem [shape: f32[1,512], index: 4, kind: input, shape index: {}]
  %s5 = inlined_call_operand.vmem [shape: f32[1,128], index: 5, kind: input, shape index: {}]
  %s6 = inlined_call_operand.vmem [shape: f32[1,128], index: 6, kind: input, shape index: {}]
  %s7 = inlined_call_operand.vmem [shape: f32[128,128], index: 7, kind: input, shape index: {}]
  %s8 = inlined_call_operand.vmem [shape: f32[8,128], index: 8, kind: output, shape index: {}]
  %s9 = sld [smem:[#allocation0]]
  $region42: #{recurrent_classifier_operator_forward.1} parent=0
    _
  %s11 = ssub.s32 1, %s9
  %s12 = scalar_select 0, %s11, %s9
  // Predicated region
  $region2: #{recurrent_classifier_operator_forward.1} parent=0 // pred_check
    _
  $region3: #{recurrent_classifier_operator_forward.1} parent=0 // pred_check_branch
    %14 = sbr.rel (0) target = $region5
  $region4: #{recurrent_classifier_operator_forward.1} parent=0 // pred_region
    _
  $region5: #{recurrent_classifier_operator_forward.1} parent=0 // pred_fallthru
    _
  // Predicated region
  $region6: #{recurrent_classifier_operator_forward.1} parent=0 // pred_check
    _
  $region7: #{recurrent_classifier_operator_forward.1} parent=0 // pred_check_branch
    %16 = sbr.rel (0) target = $region9
  $region8: #{recurrent_classifier_operator_forward.1} parent=0 // pred_region
    _
  $region9: #{recurrent_classifier_operator_forward.1} parent=0 // pred_fallthru
    _
  // Predicated region
  $region10: #{recurrent_classifier_operator_forward.1} parent=0 // pred_check
    _
  $region11: #{recurrent_classifier_operator_forward.1} parent=0 // pred_check_branch
    %18 = sbr.rel (0) target = $region13
  $region12: #{recurrent_classifier_operator_forward.1} parent=0 // pred_region
    _
  $region13: #{recurrent_classifier_operator_forward.1} parent=0 // pred_fallthru
    _
  // Predicated region
  $region14: #{recurrent_classifier_operator_forward.1} parent=0 // pred_check
    _
  $region15: #{recurrent_classifier_operator_forward.1} parent=0 // pred_check_branch
    %20 = sbr.rel (0) target = $region17
  $region16: #{recurrent_classifier_operator_forward.1} parent=0 // pred_region
    _
  $region17: #{recurrent_classifier_operator_forward.1} parent=0 // pred_fallthru
    _
  // Predicated region
  $region18: #{recurrent_classifier_operator_forward.1} parent=0 // pred_check
    _
  $region19: #{recurrent_classifier_operator_forward.1} parent=0 // pred_check_branch
    %22 = sbr.rel (0) target = $region21
  $region20: #{recurrent_classifier_operator_forward.1} parent=0 // pred_region
    _
  $region21: #{recurrent_classifier_operator_forward.1} parent=0 // pred_fallthru
    _
  // Predicated region
  $region22: #{recurrent_classifier_operator_forward.1} parent=0 // pred_check
    _
  $region23: #{recurrent_classifier_operator_forward.1} parent=0 // pred_check_branch
    %24 = sbr.rel (0) target = $region25
  $region24: #{recurrent_classifier_operator_forward.1} parent=0 // pred_region
    _
  $region25: #{recurrent_classifier_operator_forward.1} parent=0 // pred_fallthru
    _
  // Predicated region
  $region26: #{recurrent_classifier_operator_forward.1} parent=0 // pred_check
    _
  $region27: #{recurrent_classifier_operator_forward.1} parent=0 // pred_check_branch
    %26 = sbr.rel (0) target = $region29
  $region28: #{recurrent_classifier_operator_forward.1} parent=0 // pred_region
    _
  $region29: #{recurrent_classifier_operator_forward.1} parent=0 // pred_fallthru
    _
  // Predicated region
  $region30: #{recurrent_classifier_operator_forward.1} parent=0 // pred_check
    _
  $region31: #{recurrent_classifier_operator_forward.1} parent=0 // pred_check_branch
    %28 = sbr.rel (0) target = $region33
  $region32: #{recurrent_classifier_operator_forward.1} parent=0 // pred_region
    _
  $region33: #{recurrent_classifier_operator_forward.1} parent=0 // pred_fallthru
    _
  %v29 = vld [vmem:[%s0] sm:$0xff]
  %v30 = vld [vmem:[%s0 + $0x8] sm:$0xff]
  %v31 = vld [vmem:[%s0 + $0x10] sm:$0xff]
  %v32 = vld [vmem:[%s0 + $0x18] sm:$0xff]
  %v33 = vld [vmem:[%s0 + $0x20] sm:$0xff]
  %v34 = vld [vmem:[%s0 + $0x28] sm:$0xff]
  %v35 = vld [vmem:[%s0 + $0x30] sm:$0xff]
  %v36 = vld [vmem:[%s0 + $0x38] sm:$0xff]
  %v37 = vmax.f32 %v29, 0.0
  %v38 = vmax.f32 %v30, 0.0
  %v39 = vmax.f32 %v31, 0.0
  %v40 = vmax.f32 %v32, 0.0
  %v41 = vmax.f32 %v33, 0.0
  %v42 = vmax.f32 %v34, 0.0
  %v43 = vmax.f32 %v35, 0.0
  %v44 = vmax.f32 %v36, 0.0
  %v45 = vld [vmem:[%s2] sm:$0xff]
  %v46 = vld [vmem:[%s2 + $0x8] sm:$0xff]
  %v47 = vld [vmem:[%s2 + $0x10] sm:$0xff]
  %v48 = vld [vmem:[%s2 + $0x18] sm:$0xff]
  %v49 = vld [vmem:[%s2 + $0x20] sm:$0xff]
  %v50 = vld [vmem:[%s2 + $0x28] sm:$0xff]
  %v51 = vld [vmem:[%s2 + $0x30] sm:$0xff]
  %v52 = vld [vmem:[%s2 + $0x38] sm:$0xff]
  %v53 = vld [vmem:[%s2 + $0x40] sm:$0xff]
  %v54 = vld [vmem:[%s2 + $0x48] sm:$0xff]
  %v55 = vld [vmem:[%s2 + $0x50] sm:$0xff]
  %v56 = vld [vmem:[%s2 + $0x58] sm:$0xff]
  %v57 = vld [vmem:[%s2 + $0x60] sm:$0xff]
  %v58 = vld [vmem:[%s2 + $0x68] sm:$0xff]
  %v59 = vld [vmem:[%s2 + $0x70] sm:$0xff]
  %v60 = vld [vmem:[%s2 + $0x78] sm:$0xff]
  %v61 = vld [vmem:[%s4] sm:$0xf]
  %v63 = vlaneseq
  %v64 = vshrl.u32 %v63, 7
  %v65 = vsub.s32 0, %v64
  %v66 = vrot.slane %v61, %v65
  %v67 = vlaneseq
  %v68 = vshrl.u32 %v67, 7
  %v69 = vsub.s32 1, %v68
  %v70 = vrot.slane %v61, %v69
  %v71 = vlaneseq
  %v72 = vshrl.u32 %v71, 7
  %v73 = vsub.s32 2, %v72
  %v74 = vrot.slane %v61, %v73
  %v75 = vlaneseq
  %v76 = vshrl.u32 %v75, 7
  %v77 = vsub.s32 3, %v76
  %v78 = vrot.slane %v61, %v77
  %vm83 = vcmask 261120
  %v85 = vsel %vm83, %v37, 0
  %v88 = vsel %vm83, %v38, 0
  %v91 = vsel %vm83, %v39, 0
  %v94 = vsel %vm83, %v40, 0
  %v97 = vsel %vm83, %v41, 0
  %v100 = vsel %vm83, %v42, 0
  %v103 = vsel %vm83, %v43, 0
  %v106 = vsel %vm83, %v44, 0
  %108 = vmatprep.subr.mxu0 %v46
  %109 = vmatpush1.msra.mxu0 %v45
  %110 = vmatprep.subr.mxu0 %v50
  %111 = vmatpush1.msra.mxu0 %v49
  %112 = vmatprep.subr.mxu0 %v54
  %113 = vmatpush1.msra.mxu0 %v53
  %114 = vmatprep.subr.mxu0 %v58
  %115 = vmatpush1.msra.mxu0 %v57
  %116 = vmatprep.subr.mxu0 0.0
  %117 = vmatpush1.msra.mxu0 0.0
  %118 = vmatprep.subr.mxu0 0.0
  %119 = vmatpush1.msra.mxu0 0.0
  %120 = vmatprep.subr.mxu0 0.0
  %121 = vmatpush1.msra.mxu0 0.0
  %122 = vmatprep.subr.mxu0 0.0
  %123 = vmatpush1.msra.mxu0 0.0
  %124 = vmatprep.subr.mxu0 0.0
  %125 = vmatpush1.msra.mxu0 0.0
  %126 = vmatprep.subr.mxu0 0.0
  %127 = vmatpush1.msra.mxu0 0.0
  %128 = vmatprep.subr.mxu0 0.0
  %129 = vmatpush1.msra.mxu0 0.0
  %130 = vmatprep.subr.mxu0 0.0
  %131 = vmatpush1.msra.mxu0 0.0
  %132 = vmatprep.subr.mxu0 0.0
  %133 = vmatpush1.msra.mxu0 0.0
  %134 = vmatprep.subr.mxu0 0.0
  %135 = vmatpush1.msra.mxu0 0.0
  %136 = vmatprep.subr.mxu0 0.0
  %137 = vmatpush1.msra.mxu0 0.0
  %138 = vmatprep.subr.mxu0 0.0
  %139 = vmatpush1.msra.mxu0 0.0
  %140 = vmatprep.subr.mxu0 0.0
  %141 = vmatpush1.msra.mxu0 0.0
  %142 = vmatprep.subr.mxu0 0.0
  %143 = vmatpush1.msra.mxu0 0.0
  %144 = vmatprep.subr.mxu0 0.0
  %145 = vmatpush1.msra.mxu0 0.0
  %146 = vmatprep.subr.mxu0 0.0
  %147 = vmatpush1.msra.mxu0 0.0
  %148 = vmatprep.subr.mxu0 0.0
  %149 = vmatpush1.msra.mxu0 0.0
  %150 = vmatprep.subr.mxu0 0.0
  %151 = vmatpush1.msra.mxu0 0.0
  %152 = vmatprep.subr.mxu0 0.0
  %153 = vmatpush1.msra.mxu0 0.0
  %154 = vmatprep.subr.mxu0 0.0
  %155 = vmatpush1.msra.mxu0 0.0
  %156 = vmatprep.subr.mxu0 0.0
  %157 = vmatpush1.msra.mxu0 0.0
  %158 = vmatprep.subr.mxu0 0.0
  %159 = vmatpush1.msra.mxu0 0.0
  %160 = vmatprep.subr.mxu0 0.0
  %161 = vmatpush1.msra.mxu0 0.0
  %162 = vmatprep.subr.mxu0 0.0
  %163 = vmatpush1.msra.mxu0 0.0
  %164 = vmatprep.subr.mxu0 0.0
  %165 = vmatpush1.msra.mxu0 0.0
  %166 = vmatprep.subr.mxu0 0.0
  %167 = vmatpush1.msra.mxu0 0.0
  %168 = vmatprep.subr.mxu0 0.0
  %169 = vmatpush1.msra.mxu0 0.0
  %170 = vmatprep.subr.mxu0 0.0
  %171 = vmatpush1.msra.mxu0 0.0
  %172 = vmatprep.mubr.f32.mxu0 0.0
  %173 = vmatmul.mubr.f32.gmra.mrb[0].mxu0 %v85
  %v174 = vpop.f32.mrb[0].mxu0
  %v175 = vadd.f32 %v66, %v174
  %v176 = vpop.f32.mrb[0].mxu0
  %v177 = vadd.f32 %v70, %v176
  %178 = vmatprep.mubr.f32.mxu0 0.0
  %179 = vmatmul.mubr.f32.gmra.mrb[0].mxu0 %v88
  %v180 = vpop.f32.mrb[0].mxu0
  %v181 = vadd.f32 %v66, %v180
  %v182 = vpop.f32.mrb[0].mxu0
  %v183 = vadd.f32 %v70, %v182
  %184 = vmatprep.mubr.f32.mxu0 0.0
  %185 = vmatmul.mubr.f32.gmra.mrb[0].mxu0 %v91
  %v186 = vpop.f32.mrb[0].mxu0
  %v187 = vadd.f32 %v66, %v186
  %v188 = vpop.f32.mrb[0].mxu0
  %v189 = vadd.f32 %v70, %v188
  %190 = vmatprep.mubr.f32.mxu0 0.0
  %191 = vmatmul.mubr.f32.gmra.mrb[0].mxu0 %v94
  %v192 = vpop.f32.mrb[0].mxu0
  %v193 = vadd.f32 %v66, %v192
  %v194 = vpop.f32.mrb[0].mxu0
  %v195 = vadd.f32 %v70, %v194
  %196 = vmatprep.mubr.f32.mxu0 0.0
  %197 = vmatmul.mubr.f32.gmra.mrb[0].mxu0 %v97
  %v198 = vpop.f32.mrb[0].mxu0
  %v199 = vadd.f32 %v66, %v198
  %v200 = vpop.f32.mrb[0].mxu0
  %v201 = vadd.f32 %v70, %v200
  %202 = vmatprep.mubr.f32.mxu0 0.0
  %203 = vmatmul.mubr.f32.gmra.mrb[0].mxu0 %v100
  %v204 = vpop.f32.mrb[0].mxu0
  %v205 = vadd.f32 %v66, %v204
  %v206 = vpop.f32.mrb[0].mxu0
  %v207 = vadd.f32 %v70, %v206
  %208 = vmatprep.mubr.f32.mxu0 0.0
  %209 = vmatmul.mubr.f32.gmra.mrb[0].mxu0 %v103
  %v210 = vpop.f32.mrb[0].mxu0
  %v211 = vadd.f32 %v66, %v210
  %v212 = vpop.f32.mrb[0].mxu0
  %v213 = vadd.f32 %v70, %v212
  %214 = vmatprep.mubr.f32.mxu0 0.0
  %215 = vmatmul.mubr.f32.gmra.mrb[0].mxu0 %v106
  %v216 = vpop.f32.mrb[0].mxu0
  %v217 = vadd.f32 %v66, %v216
  %v218 = vpop.f32.mrb[0].mxu0
  %v219 = vadd.f32 %v70, %v218
  %220 = vdwg.mxu0
  %221 = vmatprep.subr.mxu0 %v48
  %222 = vmatpush1.msra.mxu0 %v47
  %223 = vmatprep.subr.mxu0 %v52
  %224 = vmatpush1.msra.mxu0 %v51
  %225 = vmatprep.subr.mxu0 %v56
  %226 = vmatpush1.msra.mxu0 %v55
  %227 = vmatprep.subr.mxu0 %v60
  %228 = vmatpush1.msra.mxu0 %v59
  %229 = vmatprep.subr.mxu0 0.0
  %230 = vmatpush1.msra.mxu0 0.0
  %231 = vmatprep.subr.mxu0 0.0
  %232 = vmatpush1.msra.mxu0 0.0
  %233 = vmatprep.subr.mxu0 0.0
  %234 = vmatpush1.msra.mxu0 0.0
  %235 = vmatprep.subr.mxu0 0.0
  %236 = vmatpush1.msra.mxu0 0.0
  %237 = vmatprep.subr.mxu0 0.0
  %238 = vmatpush1.msra.mxu0 0.0
  %239 = vmatprep.subr.mxu0 0.0
  %240 = vmatpush1.msra.mxu0 0.0
  %241 = vmatprep.subr.mxu0 0.0
  %242 = vmatpush1.msra.mxu0 0.0
  %243 = vmatprep.subr.mxu0 0.0
  %244 = vmatpush1.msra.mxu0 0.0
  %245 = vmatprep.subr.mxu0 0.0
  %246 = vmatpush1.msra.mxu0 0.0
  %247 = vmatprep.subr.mxu0 0.0
  %248 = vmatpush1.msra.mxu0 0.0
  %249 = vmatprep.subr.mxu0 0.0
  %250 = vmatpush1.msra.mxu0 0.0
  %251 = vmatprep.subr.mxu0 0.0
  %252 = vmatpush1.msra.mxu0 0.0
  %253 = vmatprep.subr.mxu0 0.0
  %254 = vmatpush1.msra.mxu0 0.0
  %255 = vmatprep.subr.mxu0 0.0
  %256 = vmatpush1.msra.mxu0 0.0
  %257 = vmatprep.subr.mxu0 0.0
  %258 = vmatpush1.msra.mxu0 0.0
  %259 = vmatprep.subr.mxu0 0.0
  %260 = vmatpush1.msra.mxu0 0.0
  %261 = vmatprep.subr.mxu0 0.0
  %262 = vmatpush1.msra.mxu0 0.0
  %263 = vmatprep.subr.mxu0 0.0
  %264 = vmatpush1.msra.mxu0 0.0
  %265 = vmatprep.subr.mxu0 0.0
  %266 = vmatpush1.msra.mxu0 0.0
  %267 = vmatprep.subr.mxu0 0.0
  %268 = vmatpush1.msra.mxu0 0.0
  %269 = vmatprep.subr.mxu0 0.0
  %270 = vmatpush1.msra.mxu0 0.0
  %271 = vmatprep.subr.mxu0 0.0
  %272 = vmatpush1.msra.mxu0 0.0
  %273 = vmatprep.subr.mxu0 0.0
  %274 = vmatpush1.msra.mxu0 0.0
  %275 = vmatprep.subr.mxu0 0.0
  %276 = vmatpush1.msra.mxu0 0.0
  %277 = vmatprep.subr.mxu0 0.0
  %278 = vmatpush1.msra.mxu0 0.0
  %279 = vmatprep.subr.mxu0 0.0
  %280 = vmatpush1.msra.mxu0 0.0
  %281 = vmatprep.subr.mxu0 0.0
  %282 = vmatpush1.msra.mxu0 0.0
  %283 = vmatprep.subr.mxu0 0.0
  %284 = vmatpush1.msra.mxu0 0.0
  %285 = vmatprep.mubr.f32.mxu0 0.0
  %286 = vmatmul.mubr.f32.gmra.mrb[0].mxu0 %v85
  %v287 = vpop.f32.mrb[0].mxu0
  %v288 = vadd.f32 %v74, %v287
  %v289 = vpop.f32.mrb[0].mxu0
  %v290 = vadd.f32 %v78, %v289
  %291 = vmatprep.mubr.f32.mxu0 0.0
  %292 = vmatmul.mubr.f32.gmra.mrb[0].mxu0 %v88
  %v293 = vpop.f32.mrb[0].mxu0
  %v294 = vadd.f32 %v74, %v293
  %v295 = vpop.f32.mrb[0].mxu0
  %v296 = vadd.f32 %v78, %v295
  %297 = vmatprep.mubr.f32.mxu0 0.0
  %298 = vmatmul.mubr.f32.gmra.mrb[0].mxu0 %v91
  %v299 = vpop.f32.mrb[0].mxu0
  %v300 = vadd.f32 %v74, %v299
  %v301 = vpop.f32.mrb[0].mxu0
  %v302 = vadd.f32 %v78, %v301
  %303 = vmatprep.mubr.f32.mxu0 0.0
  %304 = vmatmul.mubr.f32.gmra.mrb[0].mxu0 %v94
  %v305 = vpop.f32.mrb[0].mxu0
  %v306 = vadd.f32 %v74, %v305
  %v307 = vpop.f32.mrb[0].mxu0
  %v308 = vadd.f32 %v78, %v307
  %309 = vmatprep.mubr.f32.mxu0 0.0
  %310 = vmatmul.mubr.f32.gmra.mrb[0].mxu0 %v97
  %v311 = vpop.f32.mrb[0].mxu0
  %v312 = vadd.f32 %v74, %v311
  %v313 = vpop.f32.mrb[0].mxu0
  %v314 = vadd.f32 %v78, %v313
  %315 = vmatprep.mubr.f32.mxu0 0.0
  %316 = vmatmul.mubr.f32.gmra.mrb[0].mxu0 %v100
  %v317 = vpop.f32.mrb[0].mxu0
  %v318 = vadd.f32 %v74, %v317
  %v319 = vpop.f32.mrb[0].mxu0
  %v320 = vadd.f32 %v78, %v319
  %321 = vmatprep.mubr.f32.mxu0 0.0
  %322 = vmatmul.mubr.f32.gmra.mrb[0].mxu0 %v103
  %v323 = vpop.f32.mrb[0].mxu0
  %v324 = vadd.f32 %v74, %v323
  %v325 = vpop.f32.mrb[0].mxu0
  %v326 = vadd.f32 %v78, %v325
  %327 = vmatprep.mubr.f32.mxu0 0.0
  %328 = vmatmul.mubr.f32.gmra.mrb[0].mxu0 %v106
  %v329 = vpop.f32.mrb[0].mxu0
  %v330 = vadd.f32 %v74, %v329
  %v331 = vpop.f32.mrb[0].mxu0
  %v332 = vadd.f32 %v78, %v331
  %333 = vdwg.mxu0
  %v334 = vld [vmem:[%s3] sm:$0xff]
  %v335 = vld [vmem:[%s3 + $0x8] sm:$0xff]
  %v336 = vld [vmem:[%s3 + $0x10] sm:$0xff]
  %v337 = vld [vmem:[%s3 + $0x18] sm:$0xff]
  %v338 = vld [vmem:[%s3 + $0x20] sm:$0xff]
  %v339 = vld [vmem:[%s3 + $0x28] sm:$0xff]
  %v340 = vld [vmem:[%s3 + $0x30] sm:$0xff]
  %v341 = vld [vmem:[%s3 + $0x38] sm:$0xff]
  %v342 = vld [vmem:[%s3 + $0x40] sm:$0xff]
  %v343 = vld [vmem:[%s3 + $0x48] sm:$0xff]
  %v344 = vld [vmem:[%s3 + $0x50] sm:$0xff]
  %v345 = vld [vmem:[%s3 + $0x58] sm:$0xff]
  %v346 = vld [vmem:[%s3 + $0x60] sm:$0xff]
  %v347 = vld [vmem:[%s3 + $0x68] sm:$0xff]
  %v348 = vld [vmem:[%s3 + $0x70] sm:$0xff]
  %v349 = vld [vmem:[%s3 + $0x78] sm:$0xff]
  %v350 = vld [vmem:[%s3 + $0x80] sm:$0xff]
  %v351 = vld [vmem:[%s3 + $0x88] sm:$0xff]
  %v352 = vld [vmem:[%s3 + $0x90] sm:$0xff]
  %v353 = vld [vmem:[%s3 + $0x98] sm:$0xff]
  %v354 = vld [vmem:[%s3 + $0xa0] sm:$0xff]
  %v355 = vld [vmem:[%s3 + $0xa8] sm:$0xff]
  %v356 = vld [vmem:[%s3 + $0xb0] sm:$0xff]
  %v357 = vld [vmem:[%s3 + $0xb8] sm:$0xff]
  %v358 = vld [vmem:[%s3 + $0xc0] sm:$0xff]
  %v359 = vld [vmem:[%s3 + $0xc8] sm:$0xff]
  %v360 = vld [vmem:[%s3 + $0xd0] sm:$0xff]
  %v361 = vld [vmem:[%s3 + $0xd8] sm:$0xff]
  %v362 = vld [vmem:[%s3 + $0xe0] sm:$0xff]
  %v363 = vld [vmem:[%s3 + $0xe8] sm:$0xff]
  %v364 = vld [vmem:[%s3 + $0xf0] sm:$0xff]
  %v365 = vld [vmem:[%s3 + $0xf8] sm:$0xff]
  %v366 = vld [vmem:[%s3 + $0x100] sm:$0xff]
  %v367 = vld [vmem:[%s3 + $0x108] sm:$0xff]
  %v368 = vld [vmem:[%s3 + $0x110] sm:$0xff]
  %v369 = vld [vmem:[%s3 + $0x118] sm:$0xff]
  %v370 = vld [vmem:[%s3 + $0x120] sm:$0xff]
  %v371 = vld [vmem:[%s3 + $0x128] sm:$0xff]
  %v372 = vld [vmem:[%s3 + $0x130] sm:$0xff]
  %v373 = vld [vmem:[%s3 + $0x138] sm:$0xff]
  %v374 = vld [vmem:[%s3 + $0x140] sm:$0xff]
  %v375 = vld [vmem:[%s3 + $0x148] sm:$0xff]
  %v376 = vld [vmem:[%s3 + $0x150] sm:$0xff]
  %v377 = vld [vmem:[%s3 + $0x158] sm:$0xff]
  %v378 = vld [vmem:[%s3 + $0x160] sm:$0xff]
  %v379 = vld [vmem:[%s3 + $0x168] sm:$0xff]
  %v380 = vld [vmem:[%s3 + $0x170] sm:$0xff]
  %v381 = vld [vmem:[%s3 + $0x178] sm:$0xff]
  %v382 = vld [vmem:[%s3 + $0x180] sm:$0xff]
  %v383 = vld [vmem:[%s3 + $0x188] sm:$0xff]
  %v384 = vld [vmem:[%s3 + $0x190] sm:$0xff]
  %v385 = vld [vmem:[%s3 + $0x198] sm:$0xff]
  %v386 = vld [vmem:[%s3 + $0x1a0] sm:$0xff]
  %v387 = vld [vmem:[%s3 + $0x1a8] sm:$0xff]
  %v388 = vld [vmem:[%s3 + $0x1b0] sm:$0xff]
  %v389 = vld [vmem:[%s3 + $0x1b8] sm:$0xff]
  %v390 = vld [vmem:[%s3 + $0x1c0] sm:$0xff]
  %v391 = vld [vmem:[%s3 + $0x1c8] sm:$0xff]
  %v392 = vld [vmem:[%s3 + $0x1d0] sm:$0xff]
  %v393 = vld [vmem:[%s3 + $0x1d8] sm:$0xff]
  %v394 = vld [vmem:[%s3 + $0x1e0] sm:$0xff]
  %v395 = vld [vmem:[%s3 + $0x1e8] sm:$0xff]
  %v396 = vld [vmem:[%s3 + $0x1f0] sm:$0xff]
  %v397 = vld [vmem:[%s3 + $0x1f8] sm:$0xff]
  %v398 = vld [vmem:[%s5] sm:$0x1]
  %v400 = vlaneseq
  %v401 = vshrl.u32 %v400, 7
  %v402 = vsub.s32 0, %v401
  %v403 = vrot.slane %v398, %v402
  %v405 = vld [vmem:[%s6] sm:$0x1]
  %v407 = vlaneseq
  %v408 = vshrl.u32 %v407, 7
  %v409 = vsub.s32 0, %v408
  %v410 = vrot.slane %v405, %v409
  %412 = vmatprep.subr.mxu0 %v335
  %413 = vmatpush1.msra.mxu0 %v334
  %414 = vmatprep.subr.mxu0 %v339
  %415 = vmatpush1.msra.mxu0 %v338
  %416 = vmatprep.subr.mxu0 %v343
  %417 = vmatpush1.msra.mxu0 %v342
  %418 = vmatprep.subr.mxu0 %v347
  %419 = vmatpush1.msra.mxu0 %v346
  %420 = vmatprep.subr.mxu0 %v351
  %421 = vmatpush1.msra.mxu0 %v350
  %422 = vmatprep.subr.mxu0 %v355
  %423 = vmatpush1.msra.mxu0 %v354
  %424 = vmatprep.subr.mxu0 %v359
  %425 = vmatpush1.msra.mxu0 %v358
  %426 = vmatprep.subr.mxu0 %v363
  %427 = vmatpush1.msra.mxu0 %v362
  %428 = vmatprep.subr.mxu0 %v367
  %429 = vmatpush1.msra.mxu0 %v366
  %430 = vmatprep.subr.mxu0 %v371
  %431 = vmatpush1.msra.mxu0 %v370
  %432 = vmatprep.subr.mxu0 %v375
  %433 = vmatpush1.msra.mxu0 %v374
  %434 = vmatprep.subr.mxu0 %v379
  %435 = vmatpush1.msra.mxu0 %v378
  %436 = vmatprep.subr.mxu0 %v383
  %437 = vmatpush1.msra.mxu0 %v382
  %438 = vmatprep.subr.mxu0 %v387
  %439 = vmatpush1.msra.mxu0 %v386
  %440 = vmatprep.subr.mxu0 %v391
  %441 = vmatpush1.msra.mxu0 %v390
  %442 = vmatprep.subr.mxu0 %v395
  %443 = vmatpush1.msra.mxu0 %v394
  %444 = vmatprep.subr.mxu0 0.0
  %445 = vmatpush1.msra.mxu0 0.0
  %446 = vmatprep.subr.mxu0 0.0
  %447 = vmatpush1.msra.mxu0 0.0
  %448 = vmatprep.subr.mxu0 0.0
  %449 = vmatpush1.msra.mxu0 0.0
  %450 = vmatprep.subr.mxu0 0.0
  %451 = vmatpush1.msra.mxu0 0.0
  %452 = vmatprep.subr.mxu0 0.0
  %453 = vmatpush1.msra.mxu0 0.0
  %454 = vmatprep.subr.mxu0 0.0
  %455 = vmatpush1.msra.mxu0 0.0
  %456 = vmatprep.subr.mxu0 0.0
  %457 = vmatpush1.msra.mxu0 0.0
  %458 = vmatprep.subr.mxu0 0.0
  %459 = vmatpush1.msra.mxu0 0.0
  %460 = vmatprep.subr.mxu0 0.0
  %461 = vmatpush1.msra.mxu0 0.0
  %462 = vmatprep.subr.mxu0 0.0
  %463 = vmatpush1.msra.mxu0 0.0
  %464 = vmatprep.subr.mxu0 0.0
  %465 = vmatpush1.msra.mxu0 0.0
  %466 = vmatprep.subr.mxu0 0.0
  %467 = vmatpush1.msra.mxu0 0.0
  %468 = vmatprep.subr.mxu0 0.0
  %469 = vmatpush1.msra.mxu0 0.0
  %470 = vmatprep.subr.mxu0 0.0
  %471 = vmatpush1.msra.mxu0 0.0
  %472 = vmatprep.subr.mxu0 0.0
  %473 = vmatpush1.msra.mxu0 0.0
  %474 = vmatprep.subr.mxu0 0.0
  %475 = vmatpush1.msra.mxu0 0.0
  %476 = vmatprep.mubr.f32.mxu0 0.0
  %477 = vmatmul.mubr.f32.gmra.mrb[0].mxu0 %v403
  %v478 = vpop.f32.mrb[0].mxu0
  %v479 = vadd.f32 0.0, %v478
  %v480 = vpop.f32.mrb[0].mxu0
  %v481 = vadd.f32 0.0, %v480
  %482 = vdwg.mxu0
  %483 = vmatprep.subr.mxu0 %v337
  %484 = vmatpush1.msra.mxu0 %v336
  %485 = vmatprep.subr.mxu0 %v341
  %486 = vmatpush1.msra.mxu0 %v340
  %487 = vmatprep.subr.mxu0 %v345
  %488 = vmatpush1.msra.mxu0 %v344
  %489 = vmatprep.subr.mxu0 %v349
  %490 = vmatpush1.msra.mxu0 %v348
  %491 = vmatprep.subr.mxu0 %v353
  %492 = vmatpush1.msra.mxu0 %v352
  %493 = vmatprep.subr.mxu0 %v357
  %494 = vmatpush1.msra.mxu0 %v356
  %495 = vmatprep.subr.mxu0 %v361
  %496 = vmatpush1.msra.mxu0 %v360
  %497 = vmatprep.subr.mxu0 %v365
  %498 = vmatpush1.msra.mxu0 %v364
  %499 = vmatprep.subr.mxu0 %v369
  %500 = vmatpush1.msra.mxu0 %v368
  %501 = vmatprep.subr.mxu0 %v373
  %502 = vmatpush1.msra.mxu0 %v372
  %503 = vmatprep.subr.mxu0 %v377
  %504 = vmatpush1.msra.mxu0 %v376
  %505 = vmatprep.subr.mxu0 %v381
  %506 = vmatpush1.msra.mxu0 %v380
  %507 = vmatprep.subr.mxu0 %v385
  %508 = vmatpush1.msra.mxu0 %v384
  %509 = vmatprep.subr.mxu0 %v389
  %510 = vmatpush1.msra.mxu0 %v388
  %511 = vmatprep.subr.mxu0 %v393
  %512 = vmatpush1.msra.mxu0 %v392
  %513 = vmatprep.subr.mxu0 %v397
  %514 = vmatpush1.msra.mxu0 %v396
  %515 = vmatprep.subr.mxu0 0.0
  %516 = vmatpush1.msra.mxu0 0.0
  %517 = vmatprep.subr.mxu0 0.0
  %518 = vmatpush1.msra.mxu0 0.0
  %519 = vmatprep.subr.mxu0 0.0
  %520 = vmatpush1.msra.mxu0 0.0
  %521 = vmatprep.subr.mxu0 0.0
  %522 = vmatpush1.msra.mxu0 0.0
  %523 = vmatprep.subr.mxu0 0.0
  %524 = vmatpush1.msra.mxu0 0.0
  %525 = vmatprep.subr.mxu0 0.0
  %526 = vmatpush1.msra.mxu0 0.0
  %527 = vmatprep.subr.mxu0 0.0
  %528 = vmatpush1.msra.mxu0 0.0
  %529 = vmatprep.subr.mxu0 0.0
  %530 = vmatpush1.msra.mxu0 0.0
  %531 = vmatprep.subr.mxu0 0.0
  %532 = vmatpush1.msra.mxu0 0.0
  %533 = vmatprep.subr.mxu0 0.0
  %534 = vmatpush1.msra.mxu0 0.0
  %535 = vmatprep.subr.mxu0 0.0
  %536 = vmatpush1.msra.mxu0 0.0
  %537 = vmatprep.subr.mxu0 0.0
  %538 = vmatpush1.msra.mxu0 0.0
  %539 = vmatprep.subr.mxu0 0.0
  %540 = vmatpush1.msra.mxu0 0.0
  %541 = vmatprep.subr.mxu0 0.0
  %542 = vmatpush1.msra.mxu0 0.0
  %543 = vmatprep.subr.mxu0 0.0
  %544 = vmatpush1.msra.mxu0 0.0
  %545 = vmatprep.subr.mxu0 0.0
  %546 = vmatpush1.msra.mxu0 0.0
  %547 = vmatprep.mubr.f32.mxu0 0.0
  %548 = vmatmul.mubr.f32.gmra.mrb[0].mxu0 %v403
  %v549 = vpop.f32.mrb[0].mxu0
  %v550 = vadd.f32 0.0, %v549
  %v551 = vpop.f32.mrb[0].mxu0
  %v552 = vadd.f32 0.0, %v551
  %553 = vdwg.mxu0
  %v554 = vadd.f32 %v175, %v479
  %v555 = vadd.f32 %v177, %v481
  %v556 = vadd.f32 %v288, %v550
  %v557 = vadd.f32 %v290, %v552
  %v558 = vxor.u32 %v554, 2147483648
  %v559 = vmul.f32 %v558, 1.442695
  %v560 = vpow.pop %v559
  %v561 = vadd.f32 %v560, 1.0
  %v562 = vrcp.pop %v561
  %v563 = vmul.f32 1.0, %v562
  %v564 = vxor.u32 %v555, 2147483648
  %v565 = vmul.f32 %v564, 1.442695
  %v566 = vpow.pop %v565
  %v567 = vadd.f32 %v566, 1.0
  %v568 = vrcp.pop %v567
  %v569 = vmul.f32 1.0, %v568
  %v570 = vtanh.pop %v556
  %v571 = vxor.u32 %v557, 2147483648
  %v572 = vmul.f32 %v571, 1.442695
  %v573 = vpow.pop %v572
  %v574 = vadd.f32 %v573, 1.0
  %v575 = vrcp.pop %v574
  %v576 = vmul.f32 1.0, %v575
  %v577 = vmul.f32 %v569, %v410
  %v578 = vmul.f32 %v563, %v570
  %v579 = vadd.f32 %v577, %v578
  %v580 = vtanh.pop %v579
  %v581 = vmul.f32 %v576, %v580
  %582 = vmatprep.subr.mxu0 %v335
  %583 = vmatpush1.msra.mxu0 %v334
  %584 = vmatprep.subr.mxu0 %v339
  %585 = vmatpush1.msra.mxu0 %v338
  %586 = vmatprep.subr.mxu0 %v343
  %587 = vmatpush1.msra.mxu0 %v342
  %588 = vmatprep.subr.mxu0 %v347
  %589 = vmatpush1.msra.mxu0 %v346
  %590 = vmatprep.subr.mxu0 %v351
  %591 = vmatpush1.msra.mxu0 %v350
  %592 = vmatprep.subr.mxu0 %v355
  %593 = vmatpush1.msra.mxu0 %v354
  %594 = vmatprep.subr.mxu0 %v359
  %595 = vmatpush1.msra.mxu0 %v358
  %596 = vmatprep.subr.mxu0 %v363
  %597 = vmatpush1.msra.mxu0 %v362
  %598 = vmatprep.subr.mxu0 %v367
  %599 = vmatpush1.msra.mxu0 %v366
  %600 = vmatprep.subr.mxu0 %v371
  %601 = vmatpush1.msra.mxu0 %v370
  %602 = vmatprep.subr.mxu0 %v375
  %603 = vmatpush1.msra.mxu0 %v374
  %604 = vmatprep.subr.mxu0 %v379
  %605 = vmatpush1.msra.mxu0 %v378
  %606 = vmatprep.subr.mxu0 %v383
  %607 = vmatpush1.msra.mxu0 %v382
  %608 = vmatprep.subr.mxu0 %v387
  %609 = vmatpush1.msra.mxu0 %v386
  %610 = vmatprep.subr.mxu0 %v391
  %611 = vmatpush1.msra.mxu0 %v390
  %612 = vmatprep.subr.mxu0 %v395
  %613 = vmatpush1.msra.mxu0 %v394
  %614 = vmatprep.subr.mxu0 0.0
  %615 = vmatpush1.msra.mxu0 0.0
  %616 = vmatprep.subr.mxu0 0.0
  %617 = vmatpush1.msra.mxu0 0.0
  %618 = vmatprep.subr.mxu0 0.0
  %619 = vmatpush1.msra.mxu0 0.0
  %620 = vmatprep.subr.mxu0 0.0
  %621 = vmatpush1.msra.mxu0 0.0
  %622 = vmatprep.subr.mxu0 0.0
  %623 = vmatpush1.msra.mxu0 0.0
  %624 = vmatprep.subr.mxu0 0.0
  %625 = vmatpush1.msra.mxu0 0.0
  %626 = vmatprep.subr.mxu0 0.0
  %627 = vmatpush1.msra.mxu0 0.0
  %628 = vmatprep.subr.mxu0 0.0
  %629 = vmatpush1.msra.mxu0 0.0
  %630 = vmatprep.subr.mxu0 0.0
  %631 = vmatpush1.msra.mxu0 0.0
  %632 = vmatprep.subr.mxu0 0.0
  %633 = vmatpush1.msra.mxu0 0.0
  %634 = vmatprep.subr.mxu0 0.0
  %635 = vmatpush1.msra.mxu0 0.0
  %636 = vmatprep.subr.mxu0 0.0
  %637 = vmatpush1.msra.mxu0 0.0
  %638 = vmatprep.subr.mxu0 0.0
  %639 = vmatpush1.msra.mxu0 0.0
  %640 = vmatprep.subr.mxu0 0.0
  %641 = vmatpush1.msra.mxu0 0.0
  %642 = vmatprep.subr.mxu0 0.0
  %643 = vmatpush1.msra.mxu0 0.0
  %644 = vmatprep.subr.mxu0 0.0
  %645 = vmatpush1.msra.mxu0 0.0
  %646 = vmatprep.mubr.f32.mxu0 0.0
  %647 = vmatmul.mubr.f32.gmra.mrb[0].mxu0 %v581
  %v648 = vpop.f32.mrb[0].mxu0
  %v649 = vadd.f32 0.0, %v648
  %v650 = vpop.f32.mrb[0].mxu0
  %v651 = vadd.f32 0.0, %v650
  %652 = vdwg.mxu0
  %653 = vmatprep.subr.mxu0 %v337
  %654 = vmatpush1.msra.mxu0 %v336
  %655 = vmatprep.subr.mxu0 %v341
  %656 = vmatpush1.msra.mxu0 %v340
  %657 = vmatprep.subr.mxu0 %v345
  %658 = vmatpush1.msra.mxu0 %v344
  %659 = vmatprep.subr.mxu0 %v349
  %660 = vmatpush1.msra.mxu0 %v348
  %661 = vmatprep.subr.mxu0 %v353
  %662 = vmatpush1.msra.mxu0 %v352
  %663 = vmatprep.subr.mxu0 %v357
  %664 = vmatpush1.msra.mxu0 %v356
  %665 = vmatprep.subr.mxu0 %v361
  %666 = vmatpush1.msra.mxu0 %v360
  %667 = vmatprep.subr.mxu0 %v365
  %668 = vmatpush1.msra.mxu0 %v364
  %669 = vmatprep.subr.mxu0 %v369
  %670 = vmatpush1.msra.mxu0 %v368
  %671 = vmatprep.subr.mxu0 %v373
  %672 = vmatpush1.msra.mxu0 %v372
  %673 = vmatprep.subr.mxu0 %v377
  %674 = vmatpush1.msra.mxu0 %v376
  %675 = vmatprep.subr.mxu0 %v381
  %676 = vmatpush1.msra.mxu0 %v380
  %677 = vmatprep.subr.mxu0 %v385
  %678 = vmatpush1.msra.mxu0 %v384
  %679 = vmatprep.subr.mxu0 %v389
  %680 = vmatpush1.msra.mxu0 %v388
  %681 = vmatprep.subr.mxu0 %v393
  %682 = vmatpush1.msra.mxu0 %v392
  %683 = vmatprep.subr.mxu0 %v397
  %684 = vmatpush1.msra.mxu0 %v396
  %685 = vmatprep.subr.mxu0 0.0
  %686 = vmatpush1.msra.mxu0 0.0
  %687 = vmatprep.subr.mxu0 0.0
  %688 = vmatpush1.msra.mxu0 0.0
  %689 = vmatprep.subr.mxu0 0.0
  %690 = vmatpush1.msra.mxu0 0.0
  %691 = vmatprep.subr.mxu0 0.0
  %692 = vmatpush1.msra.mxu0 0.0
  %693 = vmatprep.subr.mxu0 0.0
  %694 = vmatpush1.msra.mxu0 0.0
  %695 = vmatprep.subr.mxu0 0.0
  %696 = vmatpush1.msra.mxu0 0.0
  %697 = vmatprep.subr.mxu0 0.0
  %698 = vmatpush1.msra.mxu0 0.0
  %699 = vmatprep.subr.mxu0 0.0
  %700 = vmatpush1.msra.mxu0 0.0
  %701 = vmatprep.subr.mxu0 0.0
  %702 = vmatpush1.msra.mxu0 0.0
  %703 = vmatprep.subr.mxu0 0.0
  %704 = vmatpush1.msra.mxu0 0.0
  %705 = vmatprep.subr.mxu0 0.0
  %706 = vmatpush1.msra.mxu0 0.0
  %707 = vmatprep.subr.mxu0 0.0
  %708 = vmatpush1.msra.mxu0 0.0
  %709 = vmatprep.subr.mxu0 0.0
  %710 = vmatpush1.msra.mxu0 0.0
  %711 = vmatprep.subr.mxu0 0.0
  %712 = vmatpush1.msra.mxu0 0.0
  %713 = vmatprep.subr.mxu0 0.0
  %714 = vmatpush1.msra.mxu0 0.0
  %715 = vmatprep.subr.mxu0 0.0
  %716 = vmatpush1.msra.mxu0 0.0
  %717 = vmatprep.mubr.f32.mxu0 0.0
  %718 = vmatmul.mubr.f32.gmra.mrb[0].mxu0 %v581
  %v719 = vpop.f32.mrb[0].mxu0
  %v720 = vadd.f32 0.0, %v719
  %v721 = vpop.f32.mrb[0].mxu0
  %v722 = vadd.f32 0.0, %v721
  %723 = vdwg.mxu0
  %v724 = vadd.f32 %v181, %v649
  %v725 = vadd.f32 %v183, %v651
  %v726 = vadd.f32 %v294, %v720
  %v727 = vadd.f32 %v296, %v722
  %v728 = vxor.u32 %v724, 2147483648
  %v729 = vmul.f32 %v728, 1.442695
  %v730 = vpow.pop %v729
  %v731 = vadd.f32 %v730, 1.0
  %v732 = vrcp.pop %v731
  %v733 = vmul.f32 1.0, %v732
  %v734 = vxor.u32 %v725, 2147483648
  %v735 = vmul.f32 %v734, 1.442695
  %v736 = vpow.pop %v735
  %v737 = vadd.f32 %v736, 1.0
  %v738 = vrcp.pop %v737
  %v739 = vmul.f32 1.0, %v738
  %v740 = vtanh.pop %v726
  %v741 = vxor.u32 %v727, 2147483648
  %v742 = vmul.f32 %v741, 1.442695
  %v743 = vpow.pop %v742
  %v744 = vadd.f32 %v743, 1.0
  %v745 = vrcp.pop %v744
  %v746 = vmul.f32 1.0, %v745
  %v747 = vmul.f32 %v739, %v579
  %v748 = vmul.f32 %v733, %v740
  %v749 = vadd.f32 %v747, %v748
  %v750 = vtanh.pop %v749
  %v751 = vmul.f32 %v746, %v750
  %752 = vmatprep.subr.mxu0 %v335
  %753 = vmatpush1.msra.mxu0 %v334
  %754 = vmatprep.subr.mxu0 %v339
  %755 = vmatpush1.msra.mxu0 %v338
  %756 = vmatprep.subr.mxu0 %v343
  %757 = vmatpush1.msra.mxu0 %v342
  %758 = vmatprep.subr.mxu0 %v347
  %759 = vmatpush1.msra.mxu0 %v346
  %760 = vmatprep.subr.mxu0 %v351
  %761 = vmatpush1.msra.mxu0 %v350
  %762 = vmatprep.subr.mxu0 %v355
  %763 = vmatpush1.msra.mxu0 %v354
  %764 = vmatprep.subr.mxu0 %v359
  %765 = vmatpush1.msra.mxu0 %v358
  %766 = vmatprep.subr.mxu0 %v363
  %767 = vmatpush1.msra.mxu0 %v362
  %768 = vmatprep.subr.mxu0 %v367
  %769 = vmatpush1.msra.mxu0 %v366
  %770 = vmatprep.subr.mxu0 %v371
  %771 = vmatpush1.msra.mxu0 %v370
  %772 = vmatprep.subr.mxu0 %v375
  %773 = vmatpush1.msra.mxu0 %v374
  %774 = vmatprep.subr.mxu0 %v379
  %775 = vmatpush1.msra.mxu0 %v378
  %776 = vmatprep.subr.mxu0 %v383
  %777 = vmatpush1.msra.mxu0 %v382
  %778 = vmatprep.subr.mxu0 %v387
  %779 = vmatpush1.msra.mxu0 %v386
  %780 = vmatprep.subr.mxu0 %v391
  %781 = vmatpush1.msra.mxu0 %v390
  %782 = vmatprep.subr.mxu0 %v395
  %783 = vmatpush1.msra.mxu0 %v394
  %784 = vmatprep.subr.mxu0 0.0
  %785 = vmatpush1.msra.mxu0 0.0
  %786 = vmatprep.subr.mxu0 0.0
  %787 = vmatpush1.msra.mxu0 0.0
  %788 = vmatprep.subr.mxu0 0.0
  %789 = vmatpush1.msra.mxu0 0.0
  %790 = vmatprep.subr.mxu0 0.0
  %791 = vmatpush1.msra.mxu0 0.0
  %792 = vmatprep.subr.mxu0 0.0
  %793 = vmatpush1.msra.mxu0 0.0
  %794 = vmatprep.subr.mxu0 0.0
  %795 = vmatpush1.msra.mxu0 0.0
  %796 = vmatprep.subr.mxu0 0.0
  %797 = vmatpush1.msra.mxu0 0.0
  %798 = vmatprep.subr.mxu0 0.0
  %799 = vmatpush1.msra.mxu0 0.0
  %800 = vmatprep.subr.mxu0 0.0
  %801 = vmatpush1.msra.mxu0 0.0
  %802 = vmatprep.subr.mxu0 0.0
  %803 = vmatpush1.msra.mxu0 0.0
  %804 = vmatprep.subr.mxu0 0.0
  %805 = vmatpush1.msra.mxu0 0.0
  %806 = vmatprep.subr.mxu0 0.0
  %807 = vmatpush1.msra.mxu0 0.0
  %808 = vmatprep.subr.mxu0 0.0
  %809 = vmatpush1.msra.mxu0 0.0
  %810 = vmatprep.subr.mxu0 0.0
  %811 = vmatpush1.msra.mxu0 0.0
  %812 = vmatprep.subr.mxu0 0.0
  %813 = vmatpush1.msra.mxu0 0.0
  %814 = vmatprep.subr.mxu0 0.0
  %815 = vmatpush1.msra.mxu0 0.0
  %816 = vmatprep.mubr.f32.mxu0 0.0
  %817 = vmatmul.mubr.f32.gmra.mrb[0].mxu0 %v751
  %v818 = vpop.f32.mrb[0].mxu0
  %v819 = vadd.f32 0.0, %v818
  %v820 = vpop.f32.mrb[0].mxu0
  %v821 = vadd.f32 0.0, %v820
  %822 = vdwg.mxu0
  %823 = vmatprep.subr.mxu0 %v337
  %824 = vmatpush1.msra.mxu0 %v336
  %825 = vmatprep.subr.mxu0 %v341
  %826 = vmatpush1.msra.mxu0 %v340
  %827 = vmatprep.subr.mxu0 %v345
  %828 = vmatpush1.msra.mxu0 %v344
  %829 = vmatprep.subr.mxu0 %v349
  %830 = vmatpush1.msra.mxu0 %v348
  %831 = vmatprep.subr.mxu0 %v353
  %832 = vmatpush1.msra.mxu0 %v352
  %833 = vmatprep.subr.mxu0 %v357
  %834 = vmatpush1.msra.mxu0 %v356
  %835 = vmatprep.subr.mxu0 %v361
  %836 = vmatpush1.msra.mxu0 %v360
  %837 = vmatprep.subr.mxu0 %v365
  %838 = vmatpush1.msra.mxu0 %v364
  %839 = vmatprep.subr.mxu0 %v369
  %840 = vmatpush1.msra.mxu0 %v368
  %841 = vmatprep.subr.mxu0 %v373
  %842 = vmatpush1.msra.mxu0 %v372
  %843 = vmatprep.subr.mxu0 %v377
  %844 = vmatpush1.msra.mxu0 %v376
  %845 = vmatprep.subr.mxu0 %v381
  %846 = vmatpush1.msra.mxu0 %v380
  %847 = vmatprep.subr.mxu0 %v385
  %848 = vmatpush1.msra.mxu0 %v384
  %849 = vmatprep.subr.mxu0 %v389
  %850 = vmatpush1.msra.mxu0 %v388
  %851 = vmatprep.subr.mxu0 %v393
  %852 = vmatpush1.msra.mxu0 %v392
  %853 = vmatprep.subr.mxu0 %v397
  %854 = vmatpush1.msra.mxu0 %v396
  %855 = vmatprep.subr.mxu0 0.0
  %856 = vmatpush1.msra.mxu0 0.0
  %857 = vmatprep.subr.mxu0 0.0
  %858 = vmatpush1.msra.mxu0 0.0
  %859 = vmatprep.subr.mxu0 0.0
  %860 = vmatpush1.msra.mxu0 0.0
  %861 = vmatprep.subr.mxu0 0.0
  %862 = vmatpush1.msra.mxu0 0.0
  %863 = vmatprep.subr.mxu0 0.0
  %864 = vmatpush1.msra.mxu0 0.0
  %865 = vmatprep.subr.mxu0 0.0
  %866 = vmatpush1.msra.mxu0 0.0
  %867 = vmatprep.subr.mxu0 0.0
  %868 = vmatpush1.msra.mxu0 0.0
  %869 = vmatprep.subr.mxu0 0.0
  %870 = vmatpush1.msra.mxu0 0.0
  %871 = vmatprep.subr.mxu0 0.0
  %872 = vmatpush1.msra.mxu0 0.0
  %873 = vmatprep.subr.mxu0 0.0
  %874 = vmatpush1.msra.mxu0 0.0
  %875 = vmatprep.subr.mxu0 0.0
  %876 = vmatpush1.msra.mxu0 0.0
  %877 = vmatprep.subr.mxu0 0.0
  %878 = vmatpush1.msra.mxu0 0.0
  %879 = vmatprep.subr.mxu0 0.0
  %880 = vmatpush1.msra.mxu0 0.0
  %881 = vmatprep.subr.mxu0 0.0
  %882 = vmatpush1.msra.mxu0 0.0
  %883 = vmatprep.subr.mxu0 0.0
  %884 = vmatpush1.msra.mxu0 0.0
  %885 = vmatprep.subr.mxu0 0.0
  %886 = vmatpush1.msra.mxu0 0.0
  %887 = vmatprep.mubr.f32.mxu0 0.0
  %888 = vmatmul.mubr.f32.gmra.mrb[0].mxu0 %v751
  %v889 = vpop.f32.mrb[0].mxu0
  %v890 = vadd.f32 0.0, %v889
  %v891 = vpop.f32.mrb[0].mxu0
  %v892 = vadd.f32 0.0, %v891
  %893 = vdwg.mxu0
  %v894 = vadd.f32 %v187, %v819
  %v895 = vadd.f32 %v189, %v821
  %v896 = vadd.f32 %v300, %v890
  %v897 = vadd.f32 %v302, %v892
  %v898 = vxor.u32 %v894, 2147483648
  %v899 = vmul.f32 %v898, 1.442695
  %v900 = vpow.pop %v899
  %v901 = vadd.f32 %v900, 1.0
  %v902 = vrcp.pop %v901
  %v903 = vmul.f32 1.0, %v902
  %v904 = vxor.u32 %v895, 2147483648
  %v905 = vmul.f32 %v904, 1.442695
  %v906 = vpow.pop %v905
  %v907 = vadd.f32 %v906, 1.0
  %v908 = vrcp.pop %v907
  %v909 = vmul.f32 1.0, %v908
  %v910 = vtanh.pop %v896
  %v911 = vxor.u32 %v897, 2147483648
  %v912 = vmul.f32 %v911, 1.442695
  %v913 = vpow.pop %v912
  %v914 = vadd.f32 %v913, 1.0
  %v915 = vrcp.pop %v914
  %v916 = vmul.f32 1.0, %v915
  %v917 = vmul.f32 %v909, %v749
  %v918 = vmul.f32 %v903, %v910
  %v919 = vadd.f32 %v917, %v918
  %v920 = vtanh.pop %v919
  %v921 = vmul.f32 %v916, %v920
  %922 = vmatprep.subr.mxu0 %v335
  %923 = vmatpush1.msra.mxu0 %v334
  %924 = vmatprep.subr.mxu0 %v339
  %925 = vmatpush1.msra.mxu0 %v338
  %926 = vmatprep.subr.mxu0 %v343
  %927 = vmatpush1.msra.mxu0 %v342
  %928 = vmatprep.subr.mxu0 %v347
  %929 = vmatpush1.msra.mxu0 %v346
  %930 = vmatprep.subr.mxu0 %v351
  %931 = vmatpush1.msra.mxu0 %v350
  %932 = vmatprep.subr.mxu0 %v355
  %933 = vmatpush1.msra.mxu0 %v354
  %934 = vmatprep.subr.mxu0 %v359
  %935 = vmatpush1.msra.mxu0 %v358
  %936 = vmatprep.subr.mxu0 %v363
  %937 = vmatpush1.msra.mxu0 %v362
  %938 = vmatprep.subr.mxu0 %v367
  %939 = vmatpush1.msra.mxu0 %v366
  %940 = vmatprep.subr.mxu0 %v371
  %941 = vmatpush1.msra.mxu0 %v370
  %942 = vmatprep.subr.mxu0 %v375
  %943 = vmatpush1.msra.mxu0 %v374
  %944 = vmatprep.subr.mxu0 %v379
  %945 = vmatpush1.msra.mxu0 %v378
  %946 = vmatprep.subr.mxu0 %v383
  %947 = vmatpush1.msra.mxu0 %v382
  %948 = vmatprep.subr.mxu0 %v387
  %949 = vmatpush1.msra.mxu0 %v386
  %950 = vmatprep.subr.mxu0 %v391
  %951 = vmatpush1.msra.mxu0 %v390
  %952 = vmatprep.subr.mxu0 %v395
  %953 = vmatpush1.msra.mxu0 %v394
  %954 = vmatprep.subr.mxu0 0.0
  %955 = vmatpush1.msra.mxu0 0.0
  %956 = vmatprep.subr.mxu0 0.0
  %957 = vmatpush1.msra.mxu0 0.0
  %958 = vmatprep.subr.mxu0 0.0
  %959 = vmatpush1.msra.mxu0 0.0
  %960 = vmatprep.subr.mxu0 0.0
  %961 = vmatpush1.msra.mxu0 0.0
  %962 = vmatprep.subr.mxu0 0.0
  %963 = vmatpush1.msra.mxu0 0.0
  %964 = vmatprep.subr.mxu0 0.0
  %965 = vmatpush1.msra.mxu0 0.0
  %966 = vmatprep.subr.mxu0 0.0
  %967 = vmatpush1.msra.mxu0 0.0
  %968 = vmatprep.subr.mxu0 0.0
  %969 = vmatpush1.msra.mxu0 0.0
  %970 = vmatprep.subr.mxu0 0.0
  %971 = vmatpush1.msra.mxu0 0.0
  %972 = vmatprep.subr.mxu0 0.0
  %973 = vmatpush1.msra.mxu0 0.0
  %974 = vmatprep.subr.mxu0 0.0
  %975 = vmatpush1.msra.mxu0 0.0
  %976 = vmatprep.subr.mxu0 0.0
  %977 = vmatpush1.msra.mxu0 0.0
  %978 = vmatprep.subr.mxu0 0.0
  %979 = vmatpush1.msra.mxu0 0.0
  %980 = vmatprep.subr.mxu0 0.0
  %981 = vmatpush1.msra.mxu0 0.0
  %982 = vmatprep.subr.mxu0 0.0
  %983 = vmatpush1.msra.mxu0 0.0
  %984 = vmatprep.subr.mxu0 0.0
  %985 = vmatpush1.msra.mxu0 0.0
  %986 = vmatprep.mubr.f32.mxu0 0.0
  %987 = vmatmul.mubr.f32.gmra.mrb[0].mxu0 %v921
  %v988 = vpop.f32.mrb[0].mxu0
  %v989 = vadd.f32 0.0, %v988
  %v990 = vpop.f32.mrb[0].mxu0
  %v991 = vadd.f32 0.0, %v990
  %992 = vdwg.mxu0
  %993 = vmatprep.subr.mxu0 %v337
  %994 = vmatpush1.msra.mxu0 %v336
  %995 = vmatprep.subr.mxu0 %v341
  %996 = vmatpush1.msra.mxu0 %v340
  %997 = vmatprep.subr.mxu0 %v345
  %998 = vmatpush1.msra.mxu0 %v344
  %999 = vmatprep.subr.mxu0 %v349
  %1000 = vmatpush1.msra.mxu0 %v348
  %1001 = vmatprep.subr.mxu0 %v353
  %1002 = vmatpush1.msra.mxu0 %v352
  %1003 = vmatprep.subr.mxu0 %v357
  %1004 = vmatpush1.msra.mxu0 %v356
  %1005 = vmatprep.subr.mxu0 %v361
  %1006 = vmatpush1.msra.mxu0 %v360
  %1007 = vmatprep.subr.mxu0 %v365
  %1008 = vmatpush1.msra.mxu0 %v364
  %1009 = vmatprep.subr.mxu0 %v369
  %1010 = vmatpush1.msra.mxu0 %v368
  %1011 = vmatprep.subr.mxu0 %v373
  %1012 = vmatpush1.msra.mxu0 %v372
  %1013 = vmatprep.subr.mxu0 %v377
  %1014 = vmatpush1.msra.mxu0 %v376
  %1015 = vmatprep.subr.mxu0 %v381
  %1016 = vmatpush1.msra.mxu0 %v380
  %1017 = vmatprep.subr.mxu0 %v385
  %1018 = vmatpush1.msra.mxu0 %v384
  %1019 = vmatprep.subr.mxu0 %v389
  %1020 = vmatpush1.msra.mxu0 %v388
  %1021 = vmatprep.subr.mxu0 %v393
  %1022 = vmatpush1.msra.mxu0 %v392
  %1023 = vmatprep.subr.mxu0 %v397
  %1024 = vmatpush1.msra.mxu0 %v396
  %1025 = vmatprep.subr.mxu0 0.0
  %1026 = vmatpush1.msra.mxu0 0.0
  %1027 = vmatprep.subr.mxu0 0.0
  %1028 = vmatpush1.msra.mxu0 0.0
  %1029 = vmatprep.subr.mxu0 0.0
  %1030 = vmatpush1.msra.mxu0 0.0
  %1031 = vmatprep.subr.mxu0 0.0
  %1032 = vmatpush1.msra.mxu0 0.0
  %1033 = vmatprep.subr.mxu0 0.0
  %1034 = vmatpush1.msra.mxu0 0.0
  %1035 = vmatprep.subr.mxu0 0.0
  %1036 = vmatpush1.msra.mxu0 0.0
  %1037 = vmatprep.subr.mxu0 0.0
  %1038 = vmatpush1.msra.mxu0 0.0
  %1039 = vmatprep.subr.mxu0 0.0
  %1040 = vmatpush1.msra.mxu0 0.0
  %1041 = vmatprep.subr.mxu0 0.0
  %1042 = vmatpush1.msra.mxu0 0.0
  %1043 = vmatprep.subr.mxu0 0.0
  %1044 = vmatpush1.msra.mxu0 0.0
  %1045 = vmatprep.subr.mxu0 0.0
  %1046 = vmatpush1.msra.mxu0 0.0
  %1047 = vmatprep.subr.mxu0 0.0
  %1048 = vmatpush1.msra.mxu0 0.0
  %1049 = vmatprep.subr.mxu0 0.0
  %1050 = vmatpush1.msra.mxu0 0.0
  %1051 = vmatprep.subr.mxu0 0.0
  %1052 = vmatpush1.msra.mxu0 0.0
  %1053 = vmatprep.subr.mxu0 0.0
  %1054 = vmatpush1.msra.mxu0 0.0
  %1055 = vmatprep.subr.mxu0 0.0
  %1056 = vmatpush1.msra.mxu0 0.0
  %1057 = vmatprep.mubr.f32.mxu0 0.0
  %1058 = vmatmul.mubr.f32.gmra.mrb[0].mxu0 %v921
  %v1059 = vpop.f32.mrb[0].mxu0
  %v1060 = vadd.f32 0.0, %v1059
  %v1061 = vpop.f32.mrb[0].mxu0
  %v1062 = vadd.f32 0.0, %v1061
  %1063 = vdwg.mxu0
  %v1064 = vadd.f32 %v193, %v989
  %v1065 = vadd.f32 %v195, %v991
  %v1066 = vadd.f32 %v306, %v1060
  %v1067 = vadd.f32 %v308, %v1062
  %v1068 = vxor.u32 %v1064, 2147483648
  %v1069 = vmul.f32 %v1068, 1.442695
  %v1070 = vpow.pop %v1069
  %v1071 = vadd.f32 %v1070, 1.0
  %v1072 = vrcp.pop %v1071
  %v1073 = vmul.f32 1.0, %v1072
  %v1074 = vxor.u32 %v1065, 2147483648
  %v1075 = vmul.f32 %v1074, 1.442695
  %v1076 = vpow.pop %v1075
  %v1077 = vadd.f32 %v1076, 1.0
  %v1078 = vrcp.pop %v1077
  %v1079 = vmul.f32 1.0, %v1078
  %v1080 = vtanh.pop %v1066
  %v1081 = vxor.u32 %v1067, 2147483648
  %v1082 = vmul.f32 %v1081, 1.442695
  %v1083 = vpow.pop %v1082
  %v1084 = vadd.f32 %v1083, 1.0
  %v1085 = vrcp.pop %v1084
  %v1086 = vmul.f32 1.0, %v1085
  %v1087 = vmul.f32 %v1079, %v919
  %v1088 = vmul.f32 %v1073, %v1080
  %v1089 = vadd.f32 %v1087, %v1088
  %v1090 = vtanh.pop %v1089
  %v1091 = vmul.f32 %v1086, %v1090
  %1092 = vmatprep.subr.mxu0 %v335
  %1093 = vmatpush1.msra.mxu0 %v334
  %1094 = vmatprep.subr.mxu0 %v339
  %1095 = vmatpush1.msra.mxu0 %v338
  %1096 = vmatprep.subr.mxu0 %v343
  %1097 = vmatpush1.msra.mxu0 %v342
  %1098 = vmatprep.subr.mxu0 %v347
  %1099 = vmatpush1.msra.mxu0 %v346
  %1100 = vmatprep.subr.mxu0 %v351
  %1101 = vmatpush1.msra.mxu0 %v350
  %1102 = vmatprep.subr.mxu0 %v355
  %1103 = vmatpush1.msra.mxu0 %v354
  %1104 = vmatprep.subr.mxu0 %v359
  %1105 = vmatpush1.msra.mxu0 %v358
  %1106 = vmatprep.subr.mxu0 %v363
  %1107 = vmatpush1.msra.mxu0 %v362
  %1108 = vmatprep.subr.mxu0 %v367
  %1109 = vmatpush1.msra.mxu0 %v366
  %1110 = vmatprep.subr.mxu0 %v371
  %1111 = vmatpush1.msra.mxu0 %v370
  %1112 = vmatprep.subr.mxu0 %v375
  %1113 = vmatpush1.msra.mxu0 %v374
  %1114 = vmatprep.subr.mxu0 %v379
  %1115 = vmatpush1.msra.mxu0 %v378
  %1116 = vmatprep.subr.mxu0 %v383
  %1117 = vmatpush1.msra.mxu0 %v382
  %1118 = vmatprep.subr.mxu0 %v387
  %1119 = vmatpush1.msra.mxu0 %v386
  %1120 = vmatprep.subr.mxu0 %v391
  %1121 = vmatpush1.msra.mxu0 %v390
  %1122 = vmatprep.subr.mxu0 %v395
  %1123 = vmatpush1.msra.mxu0 %v394
  %1124 = vmatprep.subr.mxu0 0.0
  %1125 = vmatpush1.msra.mxu0 0.0
  %1126 = vmatprep.subr.mxu0 0.0
  %1127 = vmatpush1.msra.mxu0 0.0
  %1128 = vmatprep.subr.mxu0 0.0
  %1129 = vmatpush1.msra.mxu0 0.0
  %1130 = vmatprep.subr.mxu0 0.0
  %1131 = vmatpush1.msra.mxu0 0.0
  %1132 = vmatprep.subr.mxu0 0.0
  %1133 = vmatpush1.msra.mxu0 0.0
  %1134 = vmatprep.subr.mxu0 0.0
  %1135 = vmatpush1.msra.mxu0 0.0
  %1136 = vmatprep.subr.mxu0 0.0
  %1137 = vmatpush1.msra.mxu0 0.0
  %1138 = vmatprep.subr.mxu0 0.0
  %1139 = vmatpush1.msra.mxu0 0.0
  %1140 = vmatprep.subr.mxu0 0.0
  %1141 = vmatpush1.msra.mxu0 0.0
  %1142 = vmatprep.subr.mxu0 0.0
  %1143 = vmatpush1.msra.mxu0 0.0
  %1144 = vmatprep.subr.mxu0 0.0
  %1145 = vmatpush1.msra.mxu0 0.0
  %1146 = vmatprep.subr.mxu0 0.0
  %1147 = vmatpush1.msra.mxu0 0.0
  %1148 = vmatprep.subr.mxu0 0.0
  %1149 = vmatpush1.msra.mxu0 0.0
  %1150 = vmatprep.subr.mxu0 0.0
  %1151 = vmatpush1.msra.mxu0 0.0
  %1152 = vmatprep.subr.mxu0 0.0
  %1153 = vmatpush1.msra.mxu0 0.0
  %1154 = vmatprep.subr.mxu0 0.0
  %1155 = vmatpush1.msra.mxu0 0.0
  %1156 = vmatprep.mubr.f32.mxu0 0.0
  %1157 = vmatmul.mubr.f32.gmra.mrb[0].mxu0 %v1091
  %v1158 = vpop.f32.mrb[0].mxu0
  %v1159 = vadd.f32 0.0, %v1158
  %v1160 = vpop.f32.mrb[0].mxu0
  %v1161 = vadd.f32 0.0, %v1160
  %1162 = vdwg.mxu0
  %1163 = vmatprep.subr.mxu0 %v337
  %1164 = vmatpush1.msra.mxu0 %v336
  %1165 = vmatprep.subr.mxu0 %v341
  %1166 = vmatpush1.msra.mxu0 %v340
  %1167 = vmatprep.subr.mxu0 %v345
  %1168 = vmatpush1.msra.mxu0 %v344
  %1169 = vmatprep.subr.mxu0 %v349
  %1170 = vmatpush1.msra.mxu0 %v348
  %1171 = vmatprep.subr.mxu0 %v353
  %1172 = vmatpush1.msra.mxu0 %v352
  %1173 = vmatprep.subr.mxu0 %v357
  %1174 = vmatpush1.msra.mxu0 %v356
  %1175 = vmatprep.subr.mxu0 %v361
  %1176 = vmatpush1.msra.mxu0 %v360
  %1177 = vmatprep.subr.mxu0 %v365
  %1178 = vmatpush1.msra.mxu0 %v364
  %1179 = vmatprep.subr.mxu0 %v369
  %1180 = vmatpush1.msra.mxu0 %v368
  %1181 = vmatprep.subr.mxu0 %v373
  %1182 = vmatpush1.msra.mxu0 %v372
  %1183 = vmatprep.subr.mxu0 %v377
  %1184 = vmatpush1.msra.mxu0 %v376
  %1185 = vmatprep.subr.mxu0 %v381
  %1186 = vmatpush1.msra.mxu0 %v380
  %1187 = vmatprep.subr.mxu0 %v385
  %1188 = vmatpush1.msra.mxu0 %v384
  %1189 = vmatprep.subr.mxu0 %v389
  %1190 = vmatpush1.msra.mxu0 %v388
  %1191 = vmatprep.subr.mxu0 %v393
  %1192 = vmatpush1.msra.mxu0 %v392
  %1193 = vmatprep.subr.mxu0 %v397
  %1194 = vmatpush1.msra.mxu0 %v396
  %1195 = vmatprep.subr.mxu0 0.0
  %1196 = vmatpush1.msra.mxu0 0.0
  %1197 = vmatprep.subr.mxu0 0.0
  %1198 = vmatpush1.msra.mxu0 0.0
  %1199 = vmatprep.subr.mxu0 0.0
  %1200 = vmatpush1.msra.mxu0 0.0
  %1201 = vmatprep.subr.mxu0 0.0
  %1202 = vmatpush1.msra.mxu0 0.0
  %1203 = vmatprep.subr.mxu0 0.0
  %1204 = vmatpush1.msra.mxu0 0.0
  %1205 = vmatprep.subr.mxu0 0.0
  %1206 = vmatpush1.msra.mxu0 0.0
  %1207 = vmatprep.subr.mxu0 0.0
  %1208 = vmatpush1.msra.mxu0 0.0
  %1209 = vmatprep.subr.mxu0 0.0
  %1210 = vmatpush1.msra.mxu0 0.0
  %1211 = vmatprep.subr.mxu0 0.0
  %1212 = vmatpush1.msra.mxu0 0.0
  %1213 = vmatprep.subr.mxu0 0.0
  %1214 = vmatpush1.msra.mxu0 0.0
  %1215 = vmatprep.subr.mxu0 0.0
  %1216 = vmatpush1.msra.mxu0 0.0
  %1217 = vmatprep.subr.mxu0 0.0
  %1218 = vmatpush1.msra.mxu0 0.0
  %1219 = vmatprep.subr.mxu0 0.0
  %1220 = vmatpush1.msra.mxu0 0.0
  %1221 = vmatprep.subr.mxu0 0.0
  %1222 = vmatpush1.msra.mxu0 0.0
  %1223 = vmatprep.subr.mxu0 0.0
  %1224 = vmatpush1.msra.mxu0 0.0
  %1225 = vmatprep.subr.mxu0 0.0
  %1226 = vmatpush1.msra.mxu0 0.0
  %1227 = vmatprep.mubr.f32.mxu0 0.0
  %1228 = vmatmul.mubr.f32.gmra.mrb[0].mxu0 %v1091
  %v1229 = vpop.f32.mrb[0].mxu0
  %v1230 = vadd.f32 0.0, %v1229
  %v1231 = vpop.f32.mrb[0].mxu0
  %v1232 = vadd.f32 0.0, %v1231
  %1233 = vdwg.mxu0
  %v1234 = vadd.f32 %v199, %v1159
  %v1235 = vadd.f32 %v201, %v1161
  %v1236 = vadd.f32 %v312, %v1230
  %v1237 = vadd.f32 %v314, %v1232
  %v1238 = vxor.u32 %v1234, 2147483648
  %v1239 = vmul.f32 %v1238, 1.442695
  %v1240 = vpow.pop %v1239
  %v1241 = vadd.f32 %v1240, 1.0
  %v1242 = vrcp.pop %v1241
  %v1243 = vmul.f32 1.0, %v1242
  %v1244 = vxor.u32 %v1235, 2147483648
  %v1245 = vmul.f32 %v1244, 1.442695
  %v1246 = vpow.pop %v1245
  %v1247 = vadd.f32 %v1246, 1.0
  %v1248 = vrcp.pop %v1247
  %v1249 = vmul.f32 1.0, %v1248
  %v1250 = vtanh.pop %v1236
  %v1251 = vxor.u32 %v1237, 2147483648
  %v1252 = vmul.f32 %v1251, 1.442695
  %v1253 = vpow.pop %v1252
  %v1254 = vadd.f32 %v1253, 1.0
  %v1255 = vrcp.pop %v1254
  %v1256 = vmul.f32 1.0, %v1255
  %v1257 = vmul.f32 %v1249, %v1089
  %v1258 = vmul.f32 %v1243, %v1250
  %v1259 = vadd.f32 %v1257, %v1258
  %v1260 = vtanh.pop %v1259
  %v1261 = vmul.f32 %v1256, %v1260
  %1262 = vmatprep.subr.mxu0 %v335
  %1263 = vmatpush1.msra.mxu0 %v334
  %1264 = vmatprep.subr.mxu0 %v339
  %1265 = vmatpush1.msra.mxu0 %v338
  %1266 = vmatprep.subr.mxu0 %v343
  %1267 = vmatpush1.msra.mxu0 %v342
  %1268 = vmatprep.subr.mxu0 %v347
  %1269 = vmatpush1.msra.mxu0 %v346
  %1270 = vmatprep.subr.mxu0 %v351
  %1271 = vmatpush1.msra.mxu0 %v350
  %1272 = vmatprep.subr.mxu0 %v355
  %1273 = vmatpush1.msra.mxu0 %v354
  %1274 = vmatprep.subr.mxu0 %v359
  %1275 = vmatpush1.msra.mxu0 %v358
  %1276 = vmatprep.subr.mxu0 %v363
  %1277 = vmatpush1.msra.mxu0 %v362
  %1278 = vmatprep.subr.mxu0 %v367
  %1279 = vmatpush1.msra.mxu0 %v366
  %1280 = vmatprep.subr.mxu0 %v371
  %1281 = vmatpush1.msra.mxu0 %v370
  %1282 = vmatprep.subr.mxu0 %v375
  %1283 = vmatpush1.msra.mxu0 %v374
  %1284 = vmatprep.subr.mxu0 %v379
  %1285 = vmatpush1.msra.mxu0 %v378
  %1286 = vmatprep.subr.mxu0 %v383
  %1287 = vmatpush1.msra.mxu0 %v382
  %1288 = vmatprep.subr.mxu0 %v387
  %1289 = vmatpush1.msra.mxu0 %v386
  %1290 = vmatprep.subr.mxu0 %v391
  %1291 = vmatpush1.msra.mxu0 %v390
  %1292 = vmatprep.subr.mxu0 %v395
  %1293 = vmatpush1.msra.mxu0 %v394
  %1294 = vmatprep.subr.mxu0 0.0
  %1295 = vmatpush1.msra.mxu0 0.0
  %1296 = vmatprep.subr.mxu0 0.0
  %1297 = vmatpush1.msra.mxu0 0.0
  %1298 = vmatprep.subr.mxu0 0.0
  %1299 = vmatpush1.msra.mxu0 0.0
  %1300 = vmatprep.subr.mxu0 0.0
  %1301 = vmatpush1.msra.mxu0 0.0
  %1302 = vmatprep.subr.mxu0 0.0
  %1303 = vmatpush1.msra.mxu0 0.0
  %1304 = vmatprep.subr.mxu0 0.0
  %1305 = vmatpush1.msra.mxu0 0.0
  %1306 = vmatprep.subr.mxu0 0.0
  %1307 = vmatpush1.msra.mxu0 0.0
  %1308 = vmatprep.subr.mxu0 0.0
  %1309 = vmatpush1.msra.mxu0 0.0
  %1310 = vmatprep.subr.mxu0 0.0
  %1311 = vmatpush1.msra.mxu0 0.0
  %1312 = vmatprep.subr.mxu0 0.0
  %1313 = vmatpush1.msra.mxu0 0.0
  %1314 = vmatprep.subr.mxu0 0.0
  %1315 = vmatpush1.msra.mxu0 0.0
  %1316 = vmatprep.subr.mxu0 0.0
  %1317 = vmatpush1.msra.mxu0 0.0
  %1318 = vmatprep.subr.mxu0 0.0
  %1319 = vmatpush1.msra.mxu0 0.0
  %1320 = vmatprep.subr.mxu0 0.0
  %1321 = vmatpush1.msra.mxu0 0.0
  %1322 = vmatprep.subr.mxu0 0.0
  %1323 = vmatpush1.msra.mxu0 0.0
  %1324 = vmatprep.subr.mxu0 0.0
  %1325 = vmatpush1.msra.mxu0 0.0
  %1326 = vmatprep.mubr.f32.mxu0 0.0
  %1327 = vmatmul.mubr.f32.gmra.mrb[0].mxu0 %v1261
  %v1328 = vpop.f32.mrb[0].mxu0
  %v1329 = vadd.f32 0.0, %v1328
  %v1330 = vpop.f32.mrb[0].mxu0
  %v1331 = vadd.f32 0.0, %v1330
  %1332 = vdwg.mxu0
  %1333 = vmatprep.subr.mxu0 %v337
  %1334 = vmatpush1.msra.mxu0 %v336
  %1335 = vmatprep.subr.mxu0 %v341
  %1336 = vmatpush1.msra.mxu0 %v340
  %1337 = vmatprep.subr.mxu0 %v345
  %1338 = vmatpush1.msra.mxu0 %v344
  %1339 = vmatprep.subr.mxu0 %v349
  %1340 = vmatpush1.msra.mxu0 %v348
  %1341 = vmatprep.subr.mxu0 %v353
  %1342 = vmatpush1.msra.mxu0 %v352
  %1343 = vmatprep.subr.mxu0 %v357
  %1344 = vmatpush1.msra.mxu0 %v356
  %1345 = vmatprep.subr.mxu0 %v361
  %1346 = vmatpush1.msra.mxu0 %v360
  %1347 = vmatprep.subr.mxu0 %v365
  %1348 = vmatpush1.msra.mxu0 %v364
  %1349 = vmatprep.subr.mxu0 %v369
  %1350 = vmatpush1.msra.mxu0 %v368
  %1351 = vmatprep.subr.mxu0 %v373
  %1352 = vmatpush1.msra.mxu0 %v372
  %1353 = vmatprep.subr.mxu0 %v377
  %1354 = vmatpush1.msra.mxu0 %v376
  %1355 = vmatprep.subr.mxu0 %v381
  %1356 = vmatpush1.msra.mxu0 %v380
  %1357 = vmatprep.subr.mxu0 %v385
  %1358 = vmatpush1.msra.mxu0 %v384
  %1359 = vmatprep.subr.mxu0 %v389
  %1360 = vmatpush1.msra.mxu0 %v388
  %1361 = vmatprep.subr.mxu0 %v393
  %1362 = vmatpush1.msra.mxu0 %v392
  %1363 = vmatprep.subr.mxu0 %v397
  %1364 = vmatpush1.msra.mxu0 %v396
  %1365 = vmatprep.subr.mxu0 0.0
  %1366 = vmatpush1.msra.mxu0 0.0
  %1367 = vmatprep.subr.mxu0 0.0
  %1368 = vmatpush1.msra.mxu0 0.0
  %1369 = vmatprep.subr.mxu0 0.0
  %1370 = vmatpush1.msra.mxu0 0.0
  %1371 = vmatprep.subr.mxu0 0.0
  %1372 = vmatpush1.msra.mxu0 0.0
  %1373 = vmatprep.subr.mxu0 0.0
  %1374 = vmatpush1.msra.mxu0 0.0
  %1375 = vmatprep.subr.mxu0 0.0
  %1376 = vmatpush1.msra.mxu0 0.0
  %1377 = vmatprep.subr.mxu0 0.0
  %1378 = vmatpush1.msra.mxu0 0.0
  %1379 = vmatprep.subr.mxu0 0.0
  %1380 = vmatpush1.msra.mxu0 0.0
  %1381 = vmatprep.subr.mxu0 0.0
  %1382 = vmatpush1.msra.mxu0 0.0
  %1383 = vmatprep.subr.mxu0 0.0
  %1384 = vmatpush1.msra.mxu0 0.0
  %1385 = vmatprep.subr.mxu0 0.0
  %1386 = vmatpush1.msra.mxu0 0.0
  %1387 = vmatprep.subr.mxu0 0.0
  %1388 = vmatpush1.msra.mxu0 0.0
  %1389 = vmatprep.subr.mxu0 0.0
  %1390 = vmatpush1.msra.mxu0 0.0
  %1391 = vmatprep.subr.mxu0 0.0
  %1392 = vmatpush1.msra.mxu0 0.0
  %1393 = vmatprep.subr.mxu0 0.0
  %1394 = vmatpush1.msra.mxu0 0.0
  %1395 = vmatprep.subr.mxu0 0.0
  %1396 = vmatpush1.msra.mxu0 0.0
  %1397 = vmatprep.mubr.f32.mxu0 0.0
  %1398 = vmatmul.mubr.f32.gmra.mrb[0].mxu0 %v1261
  %v1399 = vpop.f32.mrb[0].mxu0
  %v1400 = vadd.f32 0.0, %v1399
  %v1401 = vpop.f32.mrb[0].mxu0
  %v1402 = vadd.f32 0.0, %v1401
  %1403 = vdwg.mxu0
  %v1404 = vadd.f32 %v205, %v1329
  %v1405 = vadd.f32 %v207, %v1331
  %v1406 = vadd.f32 %v318, %v1400
  %v1407 = vadd.f32 %v320, %v1402
  %v1408 = vxor.u32 %v1404, 2147483648
  %v1409 = vmul.f32 %v1408, 1.442695
  %v1410 = vpow.pop %v1409
  %v1411 = vadd.f32 %v1410, 1.0
  %v1412 = vrcp.pop %v1411
  %v1413 = vmul.f32 1.0, %v1412
  %v1414 = vxor.u32 %v1405, 2147483648
  %v1415 = vmul.f32 %v1414, 1.442695
  %v1416 = vpow.pop %v1415
  %v1417 = vadd.f32 %v1416, 1.0
  %v1418 = vrcp.pop %v1417
  %v1419 = vmul.f32 1.0, %v1418
  %v1420 = vtanh.pop %v1406
  %v1421 = vxor.u32 %v1407, 2147483648
  %v1422 = vmul.f32 %v1421, 1.442695
  %v1423 = vpow.pop %v1422
  %v1424 = vadd.f32 %v1423, 1.0
  %v1425 = vrcp.pop %v1424
  %v1426 = vmul.f32 1.0, %v1425
  %v1427 = vmul.f32 %v1419, %v1259
  %v1428 = vmul.f32 %v1413, %v1420
  %v1429 = vadd.f32 %v1427, %v1428
  %v1430 = vtanh.pop %v1429
  %v1431 = vmul.f32 %v1426, %v1430
  %1432 = vmatprep.subr.mxu0 %v335
  %1433 = vmatpush1.msra.mxu0 %v334
  %1434 = vmatprep.subr.mxu0 %v339
  %1435 = vmatpush1.msra.mxu0 %v338
  %1436 = vmatprep.subr.mxu0 %v343
  %1437 = vmatpush1.msra.mxu0 %v342
  %1438 = vmatprep.subr.mxu0 %v347
  %1439 = vmatpush1.msra.mxu0 %v346
  %1440 = vmatprep.subr.mxu0 %v351
  %1441 = vmatpush1.msra.mxu0 %v350
  %1442 = vmatprep.subr.mxu0 %v355
  %1443 = vmatpush1.msra.mxu0 %v354
  %1444 = vmatprep.subr.mxu0 %v359
  %1445 = vmatpush1.msra.mxu0 %v358
  %1446 = vmatprep.subr.mxu0 %v363
  %1447 = vmatpush1.msra.mxu0 %v362
  %1448 = vmatprep.subr.mxu0 %v367
  %1449 = vmatpush1.msra.mxu0 %v366
  %1450 = vmatprep.subr.mxu0 %v371
  %1451 = vmatpush1.msra.mxu0 %v370
  %1452 = vmatprep.subr.mxu0 %v375
  %1453 = vmatpush1.msra.mxu0 %v374
  %1454 = vmatprep.subr.mxu0 %v379
  %1455 = vmatpush1.msra.mxu0 %v378
  %1456 = vmatprep.subr.mxu0 %v383
  %1457 = vmatpush1.msra.mxu0 %v382
  %1458 = vmatprep.subr.mxu0 %v387
  %1459 = vmatpush1.msra.mxu0 %v386
  %1460 = vmatprep.subr.mxu0 %v391
  %1461 = vmatpush1.msra.mxu0 %v390
  %1462 = vmatprep.subr.mxu0 %v395
  %1463 = vmatpush1.msra.mxu0 %v394
  %1464 = vmatprep.subr.mxu0 0.0
  %1465 = vmatpush1.msra.mxu0 0.0
  %1466 = vmatprep.subr.mxu0 0.0
  %1467 = vmatpush1.msra.mxu0 0.0
  %1468 = vmatprep.subr.mxu0 0.0
  %1469 = vmatpush1.msra.mxu0 0.0
  %1470 = vmatprep.subr.mxu0 0.0
  %1471 = vmatpush1.msra.mxu0 0.0
  %1472 = vmatprep.subr.mxu0 0.0
  %1473 = vmatpush1.msra.mxu0 0.0
  %1474 = vmatprep.subr.mxu0 0.0
  %1475 = vmatpush1.msra.mxu0 0.0
  %1476 = vmatprep.subr.mxu0 0.0
  %1477 = vmatpush1.msra.mxu0 0.0
  %1478 = vmatprep.subr.mxu0 0.0
  %1479 = vmatpush1.msra.mxu0 0.0
  %1480 = vmatprep.subr.mxu0 0.0
  %1481 = vmatpush1.msra.mxu0 0.0
  %1482 = vmatprep.subr.mxu0 0.0
  %1483 = vmatpush1.msra.mxu0 0.0
  %1484 = vmatprep.subr.mxu0 0.0
  %1485 = vmatpush1.msra.mxu0 0.0
  %1486 = vmatprep.subr.mxu0 0.0
  %1487 = vmatpush1.msra.mxu0 0.0
  %1488 = vmatprep.subr.mxu0 0.0
  %1489 = vmatpush1.msra.mxu0 0.0
  %1490 = vmatprep.subr.mxu0 0.0
  %1491 = vmatpush1.msra.mxu0 0.0
  %1492 = vmatprep.subr.mxu0 0.0
  %1493 = vmatpush1.msra.mxu0 0.0
  %1494 = vmatprep.subr.mxu0 0.0
  %1495 = vmatpush1.msra.mxu0 0.0
  %1496 = vmatprep.mubr.f32.mxu0 0.0
  %1497 = vmatmul.mubr.f32.gmra.mrb[0].mxu0 %v1431
  %v1498 = vpop.f32.mrb[0].mxu0
  %v1499 = vadd.f32 0.0, %v1498
  %v1500 = vpop.f32.mrb[0].mxu0
  %v1501 = vadd.f32 0.0, %v1500
  %1502 = vdwg.mxu0
  %1503 = vmatprep.subr.mxu0 %v337
  %1504 = vmatpush1.msra.mxu0 %v336
  %1505 = vmatprep.subr.mxu0 %v341
  %1506 = vmatpush1.msra.mxu0 %v340
  %1507 = vmatprep.subr.mxu0 %v345
  %1508 = vmatpush1.msra.mxu0 %v344
  %1509 = vmatprep.subr.mxu0 %v349
  %1510 = vmatpush1.msra.mxu0 %v348
  %1511 = vmatprep.subr.mxu0 %v353
  %1512 = vmatpush1.msra.mxu0 %v352
  %1513 = vmatprep.subr.mxu0 %v357
  %1514 = vmatpush1.msra.mxu0 %v356
  %1515 = vmatprep.subr.mxu0 %v361
  %1516 = vmatpush1.msra.mxu0 %v360
  %1517 = vmatprep.subr.mxu0 %v365
  %1518 = vmatpush1.msra.mxu0 %v364
  %1519 = vmatprep.subr.mxu0 %v369
  %1520 = vmatpush1.msra.mxu0 %v368
  %1521 = vmatprep.subr.mxu0 %v373
  %1522 = vmatpush1.msra.mxu0 %v372
  %1523 = vmatprep.subr.mxu0 %v377
  %1524 = vmatpush1.msra.mxu0 %v376
  %1525 = vmatprep.subr.mxu0 %v381
  %1526 = vmatpush1.msra.mxu0 %v380
  %1527 = vmatprep.subr.mxu0 %v385
  %1528 = vmatpush1.msra.mxu0 %v384
  %1529 = vmatprep.subr.mxu0 %v389
  %1530 = vmatpush1.msra.mxu0 %v388
  %1531 = vmatprep.subr.mxu0 %v393
  %1532 = vmatpush1.msra.mxu0 %v392
  %1533 = vmatprep.subr.mxu0 %v397
  %1534 = vmatpush1.msra.mxu0 %v396
  %1535 = vmatprep.subr.mxu0 0.0
  %1536 = vmatpush1.msra.mxu0 0.0
  %1537 = vmatprep.subr.mxu0 0.0
  %1538 = vmatpush1.msra.mxu0 0.0
  %1539 = vmatprep.subr.mxu0 0.0
  %1540 = vmatpush1.msra.mxu0 0.0
  %1541 = vmatprep.subr.mxu0 0.0
  %1542 = vmatpush1.msra.mxu0 0.0
  %1543 = vmatprep.subr.mxu0 0.0
  %1544 = vmatpush1.msra.mxu0 0.0
  %1545 = vmatprep.subr.mxu0 0.0
  %1546 = vmatpush1.msra.mxu0 0.0
  %1547 = vmatprep.subr.mxu0 0.0
  %1548 = vmatpush1.msra.mxu0 0.0
  %1549 = vmatprep.subr.mxu0 0.0
  %1550 = vmatpush1.msra.mxu0 0.0
  %1551 = vmatprep.subr.mxu0 0.0
  %1552 = vmatpush1.msra.mxu0 0.0
  %1553 = vmatprep.subr.mxu0 0.0
  %1554 = vmatpush1.msra.mxu0 0.0
  %1555 = vmatprep.subr.mxu0 0.0
  %1556 = vmatpush1.msra.mxu0 0.0
  %1557 = vmatprep.subr.mxu0 0.0
  %1558 = vmatpush1.msra.mxu0 0.0
  %1559 = vmatprep.subr.mxu0 0.0
  %1560 = vmatpush1.msra.mxu0 0.0
  %1561 = vmatprep.subr.mxu0 0.0
  %1562 = vmatpush1.msra.mxu0 0.0
  %1563 = vmatprep.subr.mxu0 0.0
  %1564 = vmatpush1.msra.mxu0 0.0
  %1565 = vmatprep.subr.mxu0 0.0
  %1566 = vmatpush1.msra.mxu0 0.0
  %1567 = vmatprep.mubr.f32.mxu0 0.0
  %1568 = vmatmul.mubr.f32.gmra.mrb[0].mxu0 %v1431
  %v1569 = vpop.f32.mrb[0].mxu0
  %v1570 = vadd.f32 0.0, %v1569
  %v1571 = vpop.f32.mrb[0].mxu0
  %v1572 = vadd.f32 0.0, %v1571
  %1573 = vdwg.mxu0
  %v1574 = vadd.f32 %v211, %v1499
  %v1575 = vadd.f32 %v213, %v1501
  %v1576 = vadd.f32 %v324, %v1570
  %v1577 = vadd.f32 %v326, %v1572
  %v1578 = vxor.u32 %v1574, 2147483648
  %v1579 = vmul.f32 %v1578, 1.442695
  %v1580 = vpow.pop %v1579
  %v1581 = vadd.f32 %v1580, 1.0
  %v1582 = vrcp.pop %v1581
  %v1583 = vmul.f32 1.0, %v1582
  %v1584 = vxor.u32 %v1575, 2147483648
  %v1585 = vmul.f32 %v1584, 1.442695
  %v1586 = vpow.pop %v1585
  %v1587 = vadd.f32 %v1586, 1.0
  %v1588 = vrcp.pop %v1587
  %v1589 = vmul.f32 1.0, %v1588
  %v1590 = vtanh.pop %v1576
  %v1591 = vxor.u32 %v1577, 2147483648
  %v1592 = vmul.f32 %v1591, 1.442695
  %v1593 = vpow.pop %v1592
  %v1594 = vadd.f32 %v1593, 1.0
  %v1595 = vrcp.pop %v1594
  %v1596 = vmul.f32 1.0, %v1595
  %v1597 = vmul.f32 %v1589, %v1429
  %v1598 = vmul.f32 %v1583, %v1590
  %v1599 = vadd.f32 %v1597, %v1598
  %v1600 = vtanh.pop %v1599
  %v1601 = vmul.f32 %v1596, %v1600
  %1602 = vmatprep.subr.mxu0 %v335
  %1603 = vmatpush1.msra.mxu0 %v334
  %1604 = vmatprep.subr.mxu0 %v339
  %1605 = vmatpush1.msra.mxu0 %v338
  %1606 = vmatprep.subr.mxu0 %v343
  %1607 = vmatpush1.msra.mxu0 %v342
  %1608 = vmatprep.subr.mxu0 %v347
  %1609 = vmatpush1.msra.mxu0 %v346
  %1610 = vmatprep.subr.mxu0 %v351
  %1611 = vmatpush1.msra.mxu0 %v350
  %1612 = vmatprep.subr.mxu0 %v355
  %1613 = vmatpush1.msra.mxu0 %v354
  %1614 = vmatprep.subr.mxu0 %v359
  %1615 = vmatpush1.msra.mxu0 %v358
  %1616 = vmatprep.subr.mxu0 %v363
  %1617 = vmatpush1.msra.mxu0 %v362
  %1618 = vmatprep.subr.mxu0 %v367
  %1619 = vmatpush1.msra.mxu0 %v366
  %1620 = vmatprep.subr.mxu0 %v371
  %1621 = vmatpush1.msra.mxu0 %v370
  %1622 = vmatprep.subr.mxu0 %v375
  %1623 = vmatpush1.msra.mxu0 %v374
  %1624 = vmatprep.subr.mxu0 %v379
  %1625 = vmatpush1.msra.mxu0 %v378
  %1626 = vmatprep.subr.mxu0 %v383
  %1627 = vmatpush1.msra.mxu0 %v382
  %1628 = vmatprep.subr.mxu0 %v387
  %1629 = vmatpush1.msra.mxu0 %v386
  %1630 = vmatprep.subr.mxu0 %v391
  %1631 = vmatpush1.msra.mxu0 %v390
  %1632 = vmatprep.subr.mxu0 %v395
  %1633 = vmatpush1.msra.mxu0 %v394
  %1634 = vmatprep.subr.mxu0 0.0
  %1635 = vmatpush1.msra.mxu0 0.0
  %1636 = vmatprep.subr.mxu0 0.0
  %1637 = vmatpush1.msra.mxu0 0.0
  %1638 = vmatprep.subr.mxu0 0.0
  %1639 = vmatpush1.msra.mxu0 0.0
  %1640 = vmatprep.subr.mxu0 0.0
  %1641 = vmatpush1.msra.mxu0 0.0
  %1642 = vmatprep.subr.mxu0 0.0
  %1643 = vmatpush1.msra.mxu0 0.0
  %1644 = vmatprep.subr.mxu0 0.0
  %1645 = vmatpush1.msra.mxu0 0.0
  %1646 = vmatprep.subr.mxu0 0.0
  %1647 = vmatpush1.msra.mxu0 0.0
  %1648 = vmatprep.subr.mxu0 0.0
  %1649 = vmatpush1.msra.mxu0 0.0
  %1650 = vmatprep.subr.mxu0 0.0
  %1651 = vmatpush1.msra.mxu0 0.0
  %1652 = vmatprep.subr.mxu0 0.0
  %1653 = vmatpush1.msra.mxu0 0.0
  %1654 = vmatprep.subr.mxu0 0.0
  %1655 = vmatpush1.msra.mxu0 0.0
  %1656 = vmatprep.subr.mxu0 0.0
  %1657 = vmatpush1.msra.mxu0 0.0
  %1658 = vmatprep.subr.mxu0 0.0
  %1659 = vmatpush1.msra.mxu0 0.0
  %1660 = vmatprep.subr.mxu0 0.0
  %1661 = vmatpush1.msra.mxu0 0.0
  %1662 = vmatprep.subr.mxu0 0.0
  %1663 = vmatpush1.msra.mxu0 0.0
  %1664 = vmatprep.subr.mxu0 0.0
  %1665 = vmatpush1.msra.mxu0 0.0
  %1666 = vmatprep.mubr.f32.mxu0 0.0
  %1667 = vmatmul.mubr.f32.gmra.mrb[0].mxu0 %v1601
  %v1668 = vpop.f32.mrb[0].mxu0
  %v1669 = vadd.f32 0.0, %v1668
  %v1670 = vpop.f32.mrb[0].mxu0
  %v1671 = vadd.f32 0.0, %v1670
  %1672 = vdwg.mxu0
  %1673 = vmatprep.subr.mxu0 %v337
  %1674 = vmatpush1.msra.mxu0 %v336
  %1675 = vmatprep.subr.mxu0 %v341
  %1676 = vmatpush1.msra.mxu0 %v340
  %1677 = vmatprep.subr.mxu0 %v345
  %1678 = vmatpush1.msra.mxu0 %v344
  %1679 = vmatprep.subr.mxu0 %v349
  %1680 = vmatpush1.msra.mxu0 %v348
  %1681 = vmatprep.subr.mxu0 %v353
  %1682 = vmatpush1.msra.mxu0 %v352
  %1683 = vmatprep.subr.mxu0 %v357
  %1684 = vmatpush1.msra.mxu0 %v356
  %1685 = vmatprep.subr.mxu0 %v361
  %1686 = vmatpush1.msra.mxu0 %v360
  %1687 = vmatprep.subr.mxu0 %v365
  %1688 = vmatpush1.msra.mxu0 %v364
  %1689 = vmatprep.subr.mxu0 %v369
  %1690 = vmatpush1.msra.mxu0 %v368
  %1691 = vmatprep.subr.mxu0 %v373
  %1692 = vmatpush1.msra.mxu0 %v372
  %1693 = vmatprep.subr.mxu0 %v377
  %1694 = vmatpush1.msra.mxu0 %v376
  %1695 = vmatprep.subr.mxu0 %v381
  %1696 = vmatpush1.msra.mxu0 %v380
  %1697 = vmatprep.subr.mxu0 %v385
  %1698 = vmatpush1.msra.mxu0 %v384
  %1699 = vmatprep.subr.mxu0 %v389
  %1700 = vmatpush1.msra.mxu0 %v388
  %1701 = vmatprep.subr.mxu0 %v393
  %1702 = vmatpush1.msra.mxu0 %v392
  %1703 = vmatprep.subr.mxu0 %v397
  %1704 = vmatpush1.msra.mxu0 %v396
  %1705 = vmatprep.subr.mxu0 0.0
  %1706 = vmatpush1.msra.mxu0 0.0
  %1707 = vmatprep.subr.mxu0 0.0
  %1708 = vmatpush1.msra.mxu0 0.0
  %1709 = vmatprep.subr.mxu0 0.0
  %1710 = vmatpush1.msra.mxu0 0.0
  %1711 = vmatprep.subr.mxu0 0.0
  %1712 = vmatpush1.msra.mxu0 0.0
  %1713 = vmatprep.subr.mxu0 0.0
  %1714 = vmatpush1.msra.mxu0 0.0
  %1715 = vmatprep.subr.mxu0 0.0
  %1716 = vmatpush1.msra.mxu0 0.0
  %1717 = vmatprep.subr.mxu0 0.0
  %1718 = vmatpush1.msra.mxu0 0.0
  %1719 = vmatprep.subr.mxu0 0.0
  %1720 = vmatpush1.msra.mxu0 0.0
  %1721 = vmatprep.subr.mxu0 0.0
  %1722 = vmatpush1.msra.mxu0 0.0
  %1723 = vmatprep.subr.mxu0 0.0
  %1724 = vmatpush1.msra.mxu0 0.0
  %1725 = vmatprep.subr.mxu0 0.0
  %1726 = vmatpush1.msra.mxu0 0.0
  %1727 = vmatprep.subr.mxu0 0.0
  %1728 = vmatpush1.msra.mxu0 0.0
  %1729 = vmatprep.subr.mxu0 0.0
  %1730 = vmatpush1.msra.mxu0 0.0
  %1731 = vmatprep.subr.mxu0 0.0
  %1732 = vmatpush1.msra.mxu0 0.0
  %1733 = vmatprep.subr.mxu0 0.0
  %1734 = vmatpush1.msra.mxu0 0.0
  %1735 = vmatprep.subr.mxu0 0.0
  %1736 = vmatpush1.msra.mxu0 0.0
  %1737 = vmatprep.mubr.f32.mxu0 0.0
  %1738 = vmatmul.mubr.f32.gmra.mrb[0].mxu0 %v1601
  %v1739 = vpop.f32.mrb[0].mxu0
  %v1740 = vadd.f32 0.0, %v1739
  %v1741 = vpop.f32.mrb[0].mxu0
  %v1742 = vadd.f32 0.0, %v1741
  %1743 = vdwg.mxu0
  %v1744 = vadd.f32 %v217, %v1669
  %v1745 = vadd.f32 %v219, %v1671
  %v1746 = vadd.f32 %v330, %v1740
  %v1747 = vadd.f32 %v332, %v1742
  %v1748 = vxor.u32 %v1744, 2147483648
  %v1749 = vmul.f32 %v1748, 1.442695
  %v1750 = vpow.pop %v1749
  %v1751 = vadd.f32 %v1750, 1.0
  %v1752 = vrcp.pop %v1751
  %v1753 = vmul.f32 1.0, %v1752
  %v1754 = vxor.u32 %v1745, 2147483648
  %v1755 = vmul.f32 %v1754, 1.442695
  %v1756 = vpow.pop %v1755
  %v1757 = vadd.f32 %v1756, 1.0
  %v1758 = vrcp.pop %v1757
  %v1759 = vmul.f32 1.0, %v1758
  %v1760 = vtanh.pop %v1746
  %v1761 = vxor.u32 %v1747, 2147483648
  %v1762 = vmul.f32 %v1761, 1.442695
  %v1763 = vpow.pop %v1762
  %v1764 = vadd.f32 %v1763, 1.0
  %v1765 = vrcp.pop %v1764
  %v1766 = vmul.f32 1.0, %v1765
  %v1767 = vmul.f32 %v1759, %v1599
  %v1768 = vmul.f32 %v1753, %v1760
  %v1769 = vadd.f32 %v1767, %v1768
  %v1770 = vtanh.pop %v1769
  %v1771 = vmul.f32 %v1766, %v1770
  %v1772 = vmax.f32 %v1771, 0.0
  %v1773 = vld [vmem:[%s7] sm:$0xff]
  %v1774 = vld [vmem:[%s7 + $0x8] sm:$0xff]
  %v1775 = vld [vmem:[%s7 + $0x10] sm:$0xff]
  %v1776 = vld [vmem:[%s7 + $0x18] sm:$0xff]
  %v1777 = vld [vmem:[%s7 + $0x20] sm:$0xff]
  %v1778 = vld [vmem:[%s7 + $0x28] sm:$0xff]
  %v1779 = vld [vmem:[%s7 + $0x30] sm:$0xff]
  %v1780 = vld [vmem:[%s7 + $0x38] sm:$0xff]
  %v1781 = vld [vmem:[%s7 + $0x40] sm:$0xff]
  %v1782 = vld [vmem:[%s7 + $0x48] sm:$0xff]
  %v1783 = vld [vmem:[%s7 + $0x50] sm:$0xff]
  %v1784 = vld [vmem:[%s7 + $0x58] sm:$0xff]
  %v1785 = vld [vmem:[%s7 + $0x60] sm:$0xff]
  %v1786 = vld [vmem:[%s7 + $0x68] sm:$0xff]
  %v1787 = vld [vmem:[%s7 + $0x70] sm:$0xff]
  %v1788 = vld [vmem:[%s7 + $0x78] sm:$0xff]
  %v1789 = vld [vmem:[%s1] sm:$0xff]
  %1790 = vmatprep.subr.mxu0 0.0
  %1791 = vmatpush1.msra.mxu0 %v1773
  %1792 = vmatprep.subr.mxu0 0.0
  %1793 = vmatpush1.msra.mxu0 %v1774
  %1794 = vmatprep.subr.mxu0 0.0
  %1795 = vmatpush1.msra.mxu0 %v1775
  %1796 = vmatprep.subr.mxu0 0.0
  %1797 = vmatpush1.msra.mxu0 %v1776
  %1798 = vmatprep.subr.mxu0 0.0
  %1799 = vmatpush1.msra.mxu0 %v1777
  %1800 = vmatprep.subr.mxu0 0.0
  %1801 = vmatpush1.msra.mxu0 %v1778
  %1802 = vmatprep.subr.mxu0 0.0
  %1803 = vmatpush1.msra.mxu0 %v1779
  %1804 = vmatprep.subr.mxu0 0.0
  %1805 = vmatpush1.msra.mxu0 %v1780
  %1806 = vmatprep.subr.mxu0 0.0
  %1807 = vmatpush1.msra.mxu0 %v1781
  %1808 = vmatprep.subr.mxu0 0.0
  %1809 = vmatpush1.msra.mxu0 %v1782
  %1810 = vmatprep.subr.mxu0 0.0
  %1811 = vmatpush1.msra.mxu0 %v1783
  %1812 = vmatprep.subr.mxu0 0.0
  %1813 = vmatpush1.msra.mxu0 %v1784
  %1814 = vmatprep.subr.mxu0 0.0
  %1815 = vmatpush1.msra.mxu0 %v1785
  %1816 = vmatprep.subr.mxu0 0.0
  %1817 = vmatpush1.msra.mxu0 %v1786
  %1818 = vmatprep.subr.mxu0 0.0
  %1819 = vmatpush1.msra.mxu0 %v1787
  %1820 = vmatprep.subr.mxu0 0.0
  %1821 = vmatpush1.msra.mxu0 %v1788
  %1822 = vmatprep.subr.mxu0 0.0
  %1823 = vmatpush1.msra.mxu0 0.0
  %1824 = vmatprep.subr.mxu0 0.0
  %1825 = vmatpush1.msra.mxu0 0.0
  %1826 = vmatprep.subr.mxu0 0.0
  %1827 = vmatpush1.msra.mxu0 0.0
  %1828 = vmatprep.subr.mxu0 0.0
  %1829 = vmatpush1.msra.mxu0 0.0
  %1830 = vmatprep.subr.mxu0 0.0
  %1831 = vmatpush1.msra.mxu0 0.0
  %1832 = vmatprep.subr.mxu0 0.0
  %1833 = vmatpush1.msra.mxu0 0.0
  %1834 = vmatprep.subr.mxu0 0.0
  %1835 = vmatpush1.msra.mxu0 0.0
  %1836 = vmatprep.subr.mxu0 0.0
  %1837 = vmatpush1.msra.mxu0 0.0
  %1838 = vmatprep.subr.mxu0 0.0
  %1839 = vmatpush1.msra.mxu0 0.0
  %1840 = vmatprep.subr.mxu0 0.0
  %1841 = vmatpush1.msra.mxu0 0.0
  %1842 = vmatprep.subr.mxu0 0.0
  %1843 = vmatpush1.msra.mxu0 0.0
  %1844 = vmatprep.subr.mxu0 0.0
  %1845 = vmatpush1.msra.mxu0 0.0
  %1846 = vmatprep.subr.mxu0 0.0
  %1847 = vmatpush1.msra.mxu0 0.0
  %1848 = vmatprep.subr.mxu0 0.0
  %1849 = vmatpush1.msra.mxu0 0.0
  %1850 = vmatprep.subr.mxu0 0.0
  %1851 = vmatpush1.msra.mxu0 0.0
  %1852 = vmatprep.subr.mxu0 0.0
  %1853 = vmatpush1.msra.mxu0 0.0
  %1854 = vmatprep.mubr.f32.mxu0 0.0
  %1855 = vmatmul.mubr.f32.gmra.mrb[0].mxu0 %v1772
  %v1856 = vpop.f32.mrb[0].mxu0
  %v1857 = vadd.f32 %v1789, %v1856
  %v1858 = vpop.f32.mrb[0].mxu0
  %1859 = vdwg.mxu0
  %v1860 = vxor.u32 %v1857, 2147483648
  %v1861 = vmul.f32 %v1860, 1.442695
  %v1862 = vpow.pop %v1861
  %v1863 = vadd.f32 %v1862, 1.0
  %v1864 = vrcp.pop %v1863
  %v1865 = vmul.f32 1.0, %v1864
  %1866 = vst [vmem:[%s8] sm:$0xff] %v1865
  // Predicated region
  $region34: #{recurrent_classifier_operator_forward.1} parent=0 // pred_check
    _
  $region35: #{recurrent_classifier_operator_forward.1} parent=0 // pred_check_branch
    %1868 = sbr.rel (0) target = $region37
  $region36: #{recurrent_classifier_operator_forward.1} parent=0 // pred_region
    _
  $region37: #{recurrent_classifier_operator_forward.1} parent=0 // pred_fallthru
    _
  // Predicated region
  $region38: #{recurrent_classifier_operator_forward.1} parent=0 // pred_check
    _
  $region39: #{recurrent_classifier_operator_forward.1} parent=0 // pred_check_branch
    %1870 = sbr.rel (0) target = $region41
  $region40: #{recurrent_classifier_operator_forward.1} parent=0 // pred_region
    _
  $region41: #{recurrent_classifier_operator_forward.1} parent=0 // pred_fallthru
    _

</llo_original>
